<compile_context>
chip_gen: v6e
topology: v6e:2x2x1
jax: 0.10.0
libtpu: 0.0.40
codegen_flags: <defaults>
</compile_context>

<pallas_src>
import functools

import jax
import jax.numpy as jnp
from jax import lax
from jax.experimental import pallas as pl
from jax.experimental.pallas import tpu as pltpu


# ----------------------------------------------------------------------------
# Pallas kernel: full autoregressive LSTM-PB rollout
# ----------------------------------------------------------------------------
def _rnn_pb_kernel(bias0_t0_ref, bias0_rest_ref, w_cat0_ref, w_cat_rest_ref,
                   b_rest_ref, w_out_ref, b_out_ref, post_mul_ref,
                   post_add_ref, out_ref,
                   *, num_layers, hidden_size, seq_len, unroll_all):
    """Closed-loop multi-layer LSTM rollout with the output Linear folded
    into the layer-0 weight (recurrence never waits for y).

    bias0_t0_ref   : (Bp, 4H)     layer-0 gate bias for t == 0
                                  (pb @ W_pb.T + b_ih0 + b_hh0), pre-scaled
    bias0_rest_ref : (Bp, 4H)     same + folded b_out @ W_x0.T, for t >= 1
    w_cat0_ref     : (2H, 4H)     fused [w_fold ; W_hh0.T], pre-scaled
    w_cat_rest_ref : (L-1, 2H, 4H) fused [W_ih_l.T ; W_hh_l.T], pre-scaled
    b_rest_ref     : (L-1, 1, 4H) b_ih_l + b_hh_l, pre-scaled
    w_out_ref      : (H, D)       output Linear weight.T
    b_out_ref      : (1, D)       output Linear bias
    post_mul_ref   : (1, 4H)      tanh->sigmoid fixup multiplier per lane
    post_add_ref   : (1, 4H)      tanh->sigmoid fixup offset per lane
    out_ref        : (T, Bp, D)   generated sequence (time-major)
    """
    H = hidden_size
    L = num_layers
    Bp = bias0_t0_ref.shape[0]
    D = w_out_ref.shape[1]

    # ---- hoisted, time-invariant loads & broadcasts -------------------------
    bias0_t0 = bias0_t0_ref[...]                              # (Bp, 4H)
    bias0_rest = bias0_rest_ref[...]                          # (Bp, 4H)
    w_cat0 = w_cat0_ref[...]                                  # (2H, 4H)
    w_rest = [w_cat_rest_ref[i] for i in range(L - 1)]        # (2H, 4H) each
    b_rest = [jnp.broadcast_to(b_rest_ref[i], (Bp, 4 * H))
              for i in range(L - 1)]
    w_out = w_out_ref[...]                                    # (H, D)
    b_out = jnp.broadcast_to(b_out_ref[...], (Bp, D))         # (Bp, D)
    post_mul = jnp.broadcast_to(post_mul_ref[...], (Bp, 4 * H))
    post_add = jnp.broadcast_to(post_add_ref[...], (Bp, 4 * H))

    def lstm_cell(xh, w_cat, gate_bias, c_prev):
        # One fused dot per layer per step; PyTorch gate order i, f, g, o.
        # The 0.5 pre-scale for sigmoid-via-tanh is already folded into
        # w_cat / gate_bias, so a single full-vreg tanh covers all 4 gates.
        gates = jnp.dot(xh, w_cat,
                        preferred_element_type=jnp.float32) + gate_bias
        z = jnp.tanh(gates) * post_mul + post_add             # 1 EUP push
        i_g = z[:, 0 * H:1 * H]
        f_g = z[:, 1 * H:2 * H]
        g_g = z[:, 2 * H:3 * H]
        o_g = z[:, 3 * H:4 * H]
        c_new = f_g * c_prev + i_g * g_g
        h_new = o_g * jnp.tanh(c_new)
        return h_new, c_new

    def one_step(hs, cs, gate_bias0):
        hs, cs = list(hs), list(cs)
        # layer 0: output Linear folded into w_cat0 -> input is directly
        # [h_top(t-1), h0(t-1)]; clean 2H contraction, no y on the chain.
        xh = jnp.concatenate([hs[L - 1], hs[0]], axis=1)      # (Bp, 2H)
        hs[0], cs[0] = lstm_cell(xh, w_cat0, gate_bias0, cs[0])
        for l in range(1, L):                                 # static unroll
            xh = jnp.concatenate([hs[l - 1], hs[l]], axis=1)  # (Bp, 2H)
            hs[l], cs[l] = lstm_cell(xh, w_rest[l - 1], b_rest[l - 1], cs[l])
        # output Linear only feeds out_ref; off the recurrence critical path,
        # so the scheduler overlaps it with the next step's gates matmul.
        y = jnp.dot(hs[L - 1], w_out,
                    preferred_element_type=jnp.float32) + b_out
        return y, tuple(hs), tuple(cs)

    zeros_h = jnp.zeros((Bp, H), jnp.float32)
    hs = (zeros_h,) * L
    cs = (zeros_h,) * L

    # t == 0: reference feeds literal zeros as the data input, so the folded
    # b_out term must be absent (h state is all-zero, so the w_cat0 matmul is
    # inert and only bias0_t0 reaches the gates).
    y, hs, cs = one_step(hs, cs, bias0_t0)
    out_ref[0] = y

    if unroll_all:
        # Full static unroll: cross-step scheduler visibility; state lives in
        # vregs the whole time (T, Bp, D are tiny here -> trace stays small).
        for t in range(1, seq_len):
            y, hs, cs = one_step(hs, cs, bias0_rest)
            out_ref[t] = y
    else:
        # Long-T fallback: blocked unroll so off-chain work (y, store) of one
        # step overlaps the next step's matmul while bounding trace size.
        def body(t, carry):
            hs_c, cs_c = carry
            y_t, hs_c, cs_c = one_step(hs_c, cs_c, bias0_rest)
            out_ref[t] = y_t
            return (hs_c, cs_c)
        lax.fori_loop(1, seq_len, body, (hs, cs), unroll=8)


# ----------------------------------------------------------------------------
# Wrapper: parameter packing (folding + pre-scaling) + pallas_call
# ----------------------------------------------------------------------------
def rnn_pb_rollout(pb, weights, *, num_layers, hidden_size, data_dim,
                   pb_size, seq_len):
    B = pb.shape[0]
    H, D, P, L, T = hidden_size, data_dim, pb_size, num_layers, seq_len
    Bp = ((B + 7) // 8) * 8     # pad batch to a full sublane group (once)
    f32 = jnp.float32
    hp = jax.lax.Precision.HIGHEST   # folds must not lose f32 precision

    pb_p = jnp.zeros((Bp, P), f32).at[:B].set(pb.astype(f32))

    w_ih0 = weights["weight_ih_l0"].astype(f32)       # (4H, D+P)
    w_hh0 = weights["weight_hh_l0"].astype(f32)       # (4H, H)
    b0 = (weights["bias_ih_l0"] + weights["bias_hh_l0"]).astype(f32)
    w_lin = weights["linear_w"].astype(f32)            # (D, H)
    b_lin = weights["linear_b"].astype(f32)             # (D,)

    # Lane vectors for sigmoid-via-tanh: sigmoid(x) = 0.5*tanh(0.5*x) + 0.5 on
    # the i/f/o gate columns, plain tanh on the g column.  The 0.5 pre-scale
    # (== post_mul) is folded into the packed weights/biases below.
    pre_scale = jnp.concatenate([jnp.full((2 * H,), 0.5, f32),
                                 jnp.ones((H,), f32),
                                 jnp.full((H,), 0.5, f32)])          # (4H,)
    post_mul = pre_scale.reshape(1, 4 * H)
    post_add = jnp.concatenate([jnp.full((2 * H,), 0.5, f32),
                                jnp.zeros((H,), f32),
                                jnp.full((H,), 0.5, f32)]).reshape(1, 4 * H)

    # Fold the output Linear into the layer-0 input-weight path:
    #   y(t-1) @ W_x0.T = h_top(t-1) @ (linear_w.T @ W_x0.T) + b_lin @ W_x0.T
    w_x0 = w_ih0[:, :D]                       # (4H, D)  data part of W_ih0
    w_pb0 = w_ih0[:, D:D + P]                 # (4H, P)  pb part of W_ih0
    w_fold = jnp.dot(w_lin.T, w_x0.T, precision=hp)            # (H, 4H)
    b_fold = jnp.dot(b_lin, w_x0.T, precision=hp)               # (4H,)

    # Hoisted time-invariant layer-0 gate pre-activations (pb term + biases),
    # with the sigmoid pre-scale folded in.
    pb_gates0 = jnp.dot(pb_p, w_pb0.T, precision=hp) + b0[None, :]   # (Bp, 4H)
    bias0_t0 = pb_gates0 * pre_scale[None, :]                        # t == 0
    bias0_rest = (pb_gates0 + b_fold[None, :]) * pre_scale[None, :]  # t >= 1

    # Fused layer-0 weight [h_top ; h0] -> gates, pre-scaled.
    w_cat0 = jnp.concatenate([w_fold, w_hh0.T], axis=0) * pre_scale[None, :]

    n_rest = max(L - 1, 1)      # keep a dummy slot when L == 1 (never indexed)
    w_cat_rest = jnp.zeros((n_rest, 2 * H, 4 * H), f32)
    b_rest = jnp.zeros((n_rest, 1, 4 * H), f32)
    for l in range(1, L):
        wc = jnp.concatenate(
            [weights[f"weight_ih_l{l}"].astype(f32).T,
             weights[f"weight_hh_l{l}"].astype(f32).T], axis=0)      # (2H, 4H)
        w_cat_rest = w_cat_rest.at[l - 1].set(wc * pre_scale[None, :])
        bl = (weights[f"bias_ih_l{l}"] + weights[f"bias_hh_l{l}"]).astype(f32)
        b_rest = b_rest.at[l - 1, 0].set(bl * pre_scale)

    # Output Linear (only feeds the stored sequence now).
    w_out = w_lin.T                                   # (H, D)
    b_out = b_lin.reshape(1, D)

    kernel = functools.partial(
        _rnn_pb_kernel, num_layers=L, hidden_size=H, seq_len=T,
        unroll_all=(T <= 64))

    out_p = pl.pallas_call(
        kernel,
        out_shape=jax.ShapeDtypeStruct((T, Bp, D), f32),
        in_specs=[pl.BlockSpec(memory_space=pltpu.MemorySpace.VMEM)] * 9,
        out_specs=pl.BlockSpec(memory_space=pltpu.MemorySpace.VMEM),
    )(bias0_t0, bias0_rest, w_cat0, w_cat_rest, b_rest, w_out, b_out,
      post_mul, post_add)

    return out_p[:, :B, :]


def stochastic_rnn_pb_forward(sequence_label, forward_computation_length,
                              weights, mu_pb_all, logvar_pb_all, key,
                              *, num_layers, hidden_size, data_dim, pb_size,
                              model_behavior="stochastic"):
    """Mirrors StochasticRNNPB.forward."""
    mu_pb = mu_pb_all[sequence_label]          # (B, P)
    logvar_pb = logvar_pb_all[sequence_label]  # (B, P)
    if model_behavior == "deterministic":
        pb = mu_pb
    else:  # 'stochastic' -> reparameterize (torch.randn_like -> jax.random)
        std = jnp.exp(0.5 * logvar_pb)
        eps = jax.random.normal(key, std.shape, dtype=std.dtype)
        pb = mu_pb + eps * std

    outputs = rnn_pb_rollout(
        pb, weights, num_layers=num_layers, hidden_size=hidden_size,
        data_dim=data_dim, pb_size=pb_size,
        seq_len=forward_computation_length)
    # (outputs, sequence_label, pb.squeeze(0), mu_pb, logvar_pb)
    return outputs, sequence_label, pb, mu_pb, logvar_pb


# ----------------------------------------------------------------------------
# Pure-JAX reference (mirrors PyTorch nn.LSTM / nn.Linear semantics)
# ----------------------------------------------------------------------------
def reference_rollout(pb, weights, *, num_layers, hidden_size, data_dim,
                      pb_size, seq_len):
    B = pb.shape[0]
    H, D, L = hidden_size, data_dim, num_layers
    hp = jax.lax.Precision.HIGHEST
    h = jnp.zeros((L, B, H), jnp.float32)
    c = jnp.zeros((L, B, H), jnp.float32)
    prev = jnp.zeros((B, D), jnp.float32)
    outs = []
    for _ in range(seq_len):
        x = jnp.concatenate([prev, pb], axis=1)
        for l in range(L):
            gates = (jnp.dot(x, weights[f"weight_ih_l{l}"].T, precision=hp)
                     + jnp.dot(h[l], weights[f"weight_hh_l{l}"].T, precision=hp)
                     + weights[f"bias_ih_l{l}"] + weights[f"bias_hh_l{l}"])
            i_g = jax.nn.sigmoid(gates[:, 0 * H:1 * H])
            f_g = jax.nn.sigmoid(gates[:, 1 * H:2 * H])
            g_g = jnp.tanh(gates[:, 2 * H:3 * H])
            o_g = jax.nn.sigmoid(gates[:, 3 * H:4 * H])
            c_new = f_g * c[l] + i_g * g_g
            h_new = o_g * jnp.tanh(c_new)
            c = c.at[l].set(c_new)
            h = h.at[l].set(h_new)
            x = h_new
        y = jnp.dot(h[L - 1], weights["linear_w"].T,
                    precision=hp) + weights["linear_b"]
        outs.append(y)
        prev = y
    return jnp.stack(outs, axis=0)


# ----------------------------------------------------------------------------
# Main
# ----------------------------------------------------------------------------
if __name__ == "__main__":
    # Model hyper-parameters (small, consistent with the module's __init__).
    NUM_LAYERS = 2
    DATA_DIM = 4
    PB_SIZE = 2
    HIDDEN = 32
    NUM_PB = 5      # num_sequence / num_pb
    BATCH = 2
    T = 8           # forward_computation_length

    key = jax.random.PRNGKey(0)
    keys = jax.random.split(key, 16)
    kidx = iter(range(16))

    # Deterministic parameter init (PyTorch LSTM-style uniform(-k, k)).
    k = 1.0 / jnp.sqrt(jnp.float32(HIDDEN))
    weights = {}
    for l in range(NUM_LAYERS):
        in_l = DATA_DIM + PB_SIZE if l == 0 else HIDDEN
        weights[f"weight_ih_l{l}"] = jax.random.uniform(
            keys[next(kidx)], (4 * HIDDEN, in_l), jnp.float32, -k, k)
        weights[f"weight_hh_l{l}"] = jax.random.uniform(
            keys[next(kidx)], (4 * HIDDEN, HIDDEN), jnp.float32, -k, k)
        weights[f"bias_ih_l{l}"] = jax.random.uniform(
            keys[next(kidx)], (4 * HIDDEN,), jnp.float32, -k, k)
        weights[f"bias_hh_l{l}"] = jax.random.uniform(
            keys[next(kidx)], (4 * HIDDEN,), jnp.float32, -k, k)
    weights["linear_w"] = jax.random.uniform(
        keys[next(kidx)], (DATA_DIM, HIDDEN), jnp.float32, -k, k)
    weights["linear_b"] = jax.random.uniform(
        keys[next(kidx)], (DATA_DIM,), jnp.float32, -k, k)

    # PB parameters initialized to zeros, exactly as in the module's __init__.
    mu_pb_all = jnp.zeros((NUM_PB, PB_SIZE), jnp.float32)
    logvar_pb_all = jnp.zeros((NUM_PB, PB_SIZE), jnp.float32)

    sequence_label = jnp.array([0, 3], dtype=jnp.int32)
    eps_key = keys[next(kidx)]

    outputs, seq_lab, pb, mu_pb, logvar_pb = stochastic_rnn_pb_forward(
        sequence_label, T, weights, mu_pb_all, logvar_pb_all, eps_key,
        num_layers=NUM_LAYERS, hidden_size=HIDDEN, data_dim=DATA_DIM,
        pb_size=PB_SIZE, model_behavior="stochastic")
    outputs = jax.block_until_ready(outputs)

    # Correctness check against a pure-JAX reference of the PyTorch semantics.
    # Tolerance is 1e-4: the sigmoid-via-tanh rewrite and the Linear/W_ih0
    # fold reassociate f32 ops at the ulp level, compounding over T steps.
    ref = reference_rollout(
        pb, weights, num_layers=NUM_LAYERS, hidden_size=HIDDEN,
        data_dim=DATA_DIM, pb_size=PB_SIZE, seq_len=T)
    assert outputs.shape == (T, BATCH, DATA_DIM)
    assert pb.shape == (BATCH, PB_SIZE)
    assert bool(jnp.all(jnp.isfinite(outputs)))
    assert jnp.allclose(outputs, ref, atol=1e-4, rtol=1e-4), (
        float(jnp.max(jnp.abs(outputs - ref))))

    print("KERNEL_OK")
</pallas_src>

<mosaic_0001>
module attributes {stable_mosaic.version = 11 : i64} {
  func.func @_rnn_pb_kernel(%arg0: memref<8x128xf32, #tpu.memory_space<vmem>>, %arg1: memref<8x128xf32, #tpu.memory_space<vmem>>, %arg2: memref<64x128xf32, #tpu.memory_space<vmem>>, %arg3: memref<1x64x128xf32, #tpu.memory_space<vmem>>, %arg4: memref<1x1x128xf32, #tpu.memory_space<vmem>>, %arg5: memref<32x4xf32, #tpu.memory_space<vmem>>, %arg6: memref<1x4xf32, #tpu.memory_space<vmem>>, %arg7: memref<1x128xf32, #tpu.memory_space<vmem>>, %arg8: memref<1x128xf32, #tpu.memory_space<vmem>>, %arg9: memref<8x8x4xf32, #tpu.memory_space<vmem>>) attributes {dimension_semantics = [], scalar_prefetch = 0 : i64, scratch_operands = 0 : i64, tpu.core_type = #tpu.core_type<tc>} {
    %c0 = arith.constant 0 : index
    %c0_0 = arith.constant 0 : index
    %0 = vector.load %arg0[%c0, %c0_0] : memref<8x128xf32, #tpu.memory_space<vmem>>, vector<8x128xf32>
    %c0_1 = arith.constant 0 : index
    %c0_2 = arith.constant 0 : index
    %1 = vector.load %arg1[%c0_1, %c0_2] : memref<8x128xf32, #tpu.memory_space<vmem>>, vector<8x128xf32>
    %c0_3 = arith.constant 0 : index
    %c0_4 = arith.constant 0 : index
    %2 = vector.load %arg2[%c0_3, %c0_4] : memref<64x128xf32, #tpu.memory_space<vmem>>, vector<64x128xf32>
    %c0_5 = arith.constant 0 : index
    %c0_6 = arith.constant 0 : index
    %c0_7 = arith.constant 0 : index
    %3 = vector.load %arg3[%c0_5, %c0_6, %c0_7] : memref<1x64x128xf32, #tpu.memory_space<vmem>>, vector<1x64x128xf32>
    %4 = vector.shape_cast %3 : vector<1x64x128xf32> to vector<64x128xf32>
    %c0_8 = arith.constant 0 : index
    %c0_9 = arith.constant 0 : index
    %c0_10 = arith.constant 0 : index
    %5 = vector.load %arg4[%c0_8, %c0_9, %c0_10] : memref<1x1x128xf32, #tpu.memory_space<vmem>>, vector<1x1x128xf32>
    %6 = vector.shape_cast %5 : vector<1x1x128xf32> to vector<1x128xf32>
    %7 = vector.shape_cast %6 : vector<1x128xf32> to vector<1x128xf32>
    %8 = vector.broadcast %7 : vector<1x128xf32> to vector<8x128xf32>
    %c0_11 = arith.constant 0 : index
    %c0_12 = arith.constant 0 : index
    %9 = vector.load %arg5[%c0_11, %c0_12] : memref<32x4xf32, #tpu.memory_space<vmem>>, vector<32x4xf32>
    %c0_13 = arith.constant 0 : index
    %c0_14 = arith.constant 0 : index
    %10 = vector.load %arg6[%c0_13, %c0_14] : memref<1x4xf32, #tpu.memory_space<vmem>>, vector<1x4xf32>
    %11 = vector.shape_cast %10 : vector<1x4xf32> to vector<1x4xf32>
    %12 = vector.broadcast %11 : vector<1x4xf32> to vector<8x4xf32>
    %c0_15 = arith.constant 0 : index
    %c0_16 = arith.constant 0 : index
    %13 = vector.load %arg7[%c0_15, %c0_16] : memref<1x128xf32, #tpu.memory_space<vmem>>, vector<1x128xf32>
    %14 = vector.shape_cast %13 : vector<1x128xf32> to vector<1x128xf32>
    %15 = vector.broadcast %14 : vector<1x128xf32> to vector<8x128xf32>
    %c0_17 = arith.constant 0 : index
    %c0_18 = arith.constant 0 : index
    %16 = vector.load %arg8[%c0_17, %c0_18] : memref<1x128xf32, #tpu.memory_space<vmem>>, vector<1x128xf32>
    %17 = vector.shape_cast %16 : vector<1x128xf32> to vector<1x128xf32>
    %18 = vector.broadcast %17 : vector<1x128xf32> to vector<8x128xf32>
    %cst = arith.constant 0.000000e+00 : f32
    %19 = vector.broadcast %cst : f32 to vector<8x32xf32>
    %20 = tpu.concatenate %19, %19 in 1 : vector<8x32xf32>, vector<8x32xf32> -> vector<8x64xf32>
    %cst_19 = arith.constant dense<0.000000e+00> : vector<8x128xf32>
    %21 = tpu.matmul %20, %2, %cst_19 {dimension_numbers = #tpu.dot_dimension_numbers<[1], [0], [0], [1], [0, 0, 1, 1], [], []>} : vector<8x64xf32>, vector<64x128xf32>, vector<8x128xf32> -> vector<8x128xf32>
    %22 = arith.addf %21, %0 : vector<8x128xf32>
    %23 = math.tanh %22 : vector<8x128xf32>
    %24 = arith.mulf %23, %15 : vector<8x128xf32>
    %25 = arith.addf %24, %18 : vector<8x128xf32>
    %26 = vector.extract_strided_slice %25 {offsets = [0, 0], sizes = [8, 32], strides = [1, 1]} : vector<8x128xf32> to vector<8x32xf32>
    %27 = vector.extract_strided_slice %25 {offsets = [0, 32], sizes = [8, 32], strides = [1, 1]} : vector<8x128xf32> to vector<8x32xf32>
    %28 = vector.extract_strided_slice %25 {offsets = [0, 64], sizes = [8, 32], strides = [1, 1]} : vector<8x128xf32> to vector<8x32xf32>
    %29 = vector.extract_strided_slice %25 {offsets = [0, 96], sizes = [8, 32], strides = [1, 1]} : vector<8x128xf32> to vector<8x32xf32>
    %30 = arith.mulf %27, %19 : vector<8x32xf32>
    %31 = arith.mulf %26, %28 : vector<8x32xf32>
    %32 = arith.addf %30, %31 : vector<8x32xf32>
    %33 = math.tanh %32 : vector<8x32xf32>
    %34 = arith.mulf %29, %33 : vector<8x32xf32>
    %35 = tpu.concatenate %34, %19 in 1 : vector<8x32xf32>, vector<8x32xf32> -> vector<8x64xf32>
    %cst_20 = arith.constant dense<0.000000e+00> : vector<8x128xf32>
    %36 = tpu.matmul %35, %4, %cst_20 {dimension_numbers = #tpu.dot_dimension_numbers<[1], [0], [0], [1], [0, 0, 1, 1], [], []>} : vector<8x64xf32>, vector<64x128xf32>, vector<8x128xf32> -> vector<8x128xf32>
    %37 = arith.addf %36, %8 : vector<8x128xf32>
    %38 = math.tanh %37 : vector<8x128xf32>
    %39 = arith.mulf %38, %15 : vector<8x128xf32>
    %40 = arith.addf %39, %18 : vector<8x128xf32>
    %41 = vector.extract_strided_slice %40 {offsets = [0, 0], sizes = [8, 32], strides = [1, 1]} : vector<8x128xf32> to vector<8x32xf32>
    %42 = vector.extract_strided_slice %40 {offsets = [0, 32], sizes = [8, 32], strides = [1, 1]} : vector<8x128xf32> to vector<8x32xf32>
    %43 = vector.extract_strided_slice %40 {offsets = [0, 64], sizes = [8, 32], strides = [1, 1]} : vector<8x128xf32> to vector<8x32xf32>
    %44 = vector.extract_strided_slice %40 {offsets = [0, 96], sizes = [8, 32], strides = [1, 1]} : vector<8x128xf32> to vector<8x32xf32>
    %45 = arith.mulf %42, %19 : vector<8x32xf32>
    %46 = arith.mulf %41, %43 : vector<8x32xf32>
    %47 = arith.addf %45, %46 : vector<8x32xf32>
    %48 = math.tanh %47 : vector<8x32xf32>
    %49 = arith.mulf %44, %48 : vector<8x32xf32>
    %cst_21 = arith.constant dense<0.000000e+00> : vector<8x4xf32>
    %50 = tpu.matmul %49, %9, %cst_21 {dimension_numbers = #tpu.dot_dimension_numbers<[1], [0], [0], [1], [0, 0, 1, 1], [], []>} : vector<8x32xf32>, vector<32x4xf32>, vector<8x4xf32> -> vector<8x4xf32>
    %51 = arith.addf %50, %12 : vector<8x4xf32>
    %c0_22 = arith.constant 0 : index
    %c0_23 = arith.constant 0 : index
    %c0_24 = arith.constant 0 : index
    %52 = vector.load %arg9[%c0_22, %c0_23, %c0_24] : memref<8x8x4xf32, #tpu.memory_space<vmem>>, vector<1x8x4xf32>
    %53 = vector.shape_cast %52 : vector<1x8x4xf32> to vector<8x4xf32>
    %54 = vector.shape_cast %51 : vector<8x4xf32> to vector<1x8x4xf32>
    tpu.vector_store %arg9[%c0_22, %c0_23, %c0_24], %54 {strides = array<i32>} : memref<8x8x4xf32, #tpu.memory_space<vmem>>, vector<1x8x4xf32>,
    %55 = tpu.concatenate %49, %34 in 1 : vector<8x32xf32>, vector<8x32xf32> -> vector<8x64xf32>
    %cst_25 = arith.constant dense<0.000000e+00> : vector<8x128xf32>
    %56 = tpu.matmul %55, %2, %cst_25 {dimension_numbers = #tpu.dot_dimension_numbers<[1], [0], [0], [1], [0, 0, 1, 1], [], []>} : vector<8x64xf32>, vector<64x128xf32>, vector<8x128xf32> -> vector<8x128xf32>
    %57 = arith.addf %56, %1 : vector<8x128xf32>
    %58 = math.tanh %57 : vector<8x128xf32>
    %59 = arith.mulf %58, %15 : vector<8x128xf32>
    %60 = arith.addf %59, %18 : vector<8x128xf32>
    %61 = vector.extract_strided_slice %60 {offsets = [0, 0], sizes = [8, 32], strides = [1, 1]} : vector<8x128xf32> to vector<8x32xf32>
    %62 = vector.extract_strided_slice %60 {offsets = [0, 32], sizes = [8, 32], strides = [1, 1]} : vector<8x128xf32> to vector<8x32xf32>
    %63 = vector.extract_strided_slice %60 {offsets = [0, 64], sizes = [8, 32], strides = [1, 1]} : vector<8x128xf32> to vector<8x32xf32>
    %64 = vector.extract_strided_slice %60 {offsets = [0, 96], sizes = [8, 32], strides = [1, 1]} : vector<8x128xf32> to vector<8x32xf32>
    %65 = arith.mulf %62, %32 : vector<8x32xf32>
    %66 = arith.mulf %61, %63 : vector<8x32xf32>
    %67 = arith.addf %65, %66 : vector<8x32xf32>
    %68 = math.tanh %67 : vector<8x32xf32>
    %69 = arith.mulf %64, %68 : vector<8x32xf32>
    %70 = tpu.concatenate %69, %49 in 1 : vector<8x32xf32>, vector<8x32xf32> -> vector<8x64xf32>
    %cst_26 = arith.constant dense<0.000000e+00> : vector<8x128xf32>
    %71 = tpu.matmul %70, %4, %cst_26 {dimension_numbers = #tpu.dot_dimension_numbers<[1], [0], [0], [1], [0, 0, 1, 1], [], []>} : vector<8x64xf32>, vector<64x128xf32>, vector<8x128xf32> -> vector<8x128xf32>
    %72 = arith.addf %71, %8 : vector<8x128xf32>
    %73 = math.tanh %72 : vector<8x128xf32>
    %74 = arith.mulf %73, %15 : vector<8x128xf32>
    %75 = arith.addf %74, %18 : vector<8x128xf32>
    %76 = vector.extract_strided_slice %75 {offsets = [0, 0], sizes = [8, 32], strides = [1, 1]} : vector<8x128xf32> to vector<8x32xf32>
    %77 = vector.extract_strided_slice %75 {offsets = [0, 32], sizes = [8, 32], strides = [1, 1]} : vector<8x128xf32> to vector<8x32xf32>
    %78 = vector.extract_strided_slice %75 {offsets = [0, 64], sizes = [8, 32], strides = [1, 1]} : vector<8x128xf32> to vector<8x32xf32>
    %79 = vector.extract_strided_slice %75 {offsets = [0, 96], sizes = [8, 32], strides = [1, 1]} : vector<8x128xf32> to vector<8x32xf32>
    %80 = arith.mulf %77, %47 : vector<8x32xf32>
    %81 = arith.mulf %76, %78 : vector<8x32xf32>
    %82 = arith.addf %80, %81 : vector<8x32xf32>
    %83 = math.tanh %82 : vector<8x32xf32>
    %84 = arith.mulf %79, %83 : vector<8x32xf32>
    %cst_27 = arith.constant dense<0.000000e+00> : vector<8x4xf32>
    %85 = tpu.matmul %84, %9, %cst_27 {dimension_numbers = #tpu.dot_dimension_numbers<[1], [0], [0], [1], [0, 0, 1, 1], [], []>} : vector<8x32xf32>, vector<32x4xf32>, vector<8x4xf32> -> vector<8x4xf32>
    %86 = arith.addf %85, %12 : vector<8x4xf32>
    %c1 = arith.constant 1 : index
    %c0_28 = arith.constant 0 : index
    %c0_29 = arith.constant 0 : index
    %87 = vector.load %arg9[%c1, %c0_28, %c0_29] : memref<8x8x4xf32, #tpu.memory_space<vmem>>, vector<1x8x4xf32>
    %88 = vector.shape_cast %87 : vector<1x8x4xf32> to vector<8x4xf32>
    %89 = vector.shape_cast %86 : vector<8x4xf32> to vector<1x8x4xf32>
    tpu.vector_store %arg9[%c1, %c0_28, %c0_29], %89 {strides = array<i32>} : memref<8x8x4xf32, #tpu.memory_space<vmem>>, vector<1x8x4xf32>,
    %90 = tpu.concatenate %84, %69 in 1 : vector<8x32xf32>, vector<8x32xf32> -> vector<8x64xf32>
    %cst_30 = arith.constant dense<0.000000e+00> : vector<8x128xf32>
    %91 = tpu.matmul %90, %2, %cst_30 {dimension_numbers = #tpu.dot_dimension_numbers<[1], [0], [0], [1], [0, 0, 1, 1], [], []>} : vector<8x64xf32>, vector<64x128xf32>, vector<8x128xf32> -> vector<8x128xf32>
    %92 = arith.addf %91, %1 : vector<8x128xf32>
    %93 = math.tanh %92 : vector<8x128xf32>
    %94 = arith.mulf %93, %15 : vector<8x128xf32>
    %95 = arith.addf %94, %18 : vector<8x128xf32>
    %96 = vector.extract_strided_slice %95 {offsets = [0, 0], sizes = [8, 32], strides = [1, 1]} : vector<8x128xf32> to vector<8x32xf32>
    %97 = vector.extract_strided_slice %95 {offsets = [0, 32], sizes = [8, 32], strides = [1, 1]} : vector<8x128xf32> to vector<8x32xf32>
    %98 = vector.extract_strided_slice %95 {offsets = [0, 64], sizes = [8, 32], strides = [1, 1]} : vector<8x128xf32> to vector<8x32xf32>
    %99 = vector.extract_strided_slice %95 {offsets = [0, 96], sizes = [8, 32], strides = [1, 1]} : vector<8x128xf32> to vector<8x32xf32>
    %100 = arith.mulf %97, %67 : vector<8x32xf32>
    %101 = arith.mulf %96, %98 : vector<8x32xf32>
    %102 = arith.addf %100, %101 : vector<8x32xf32>
    %103 = math.tanh %102 : vector<8x32xf32>
    %104 = arith.mulf %99, %103 : vector<8x32xf32>
    %105 = tpu.concatenate %104, %84 in 1 : vector<8x32xf32>, vector<8x32xf32> -> vector<8x64xf32>
    %cst_31 = arith.constant dense<0.000000e+00> : vector<8x128xf32>
    %106 = tpu.matmul %105, %4, %cst_31 {dimension_numbers = #tpu.dot_dimension_numbers<[1], [0], [0], [1], [0, 0, 1, 1], [], []>} : vector<8x64xf32>, vector<64x128xf32>, vector<8x128xf32> -> vector<8x128xf32>
    %107 = arith.addf %106, %8 : vector<8x128xf32>
    %108 = math.tanh %107 : vector<8x128xf32>
    %109 = arith.mulf %108, %15 : vector<8x128xf32>
    %110 = arith.addf %109, %18 : vector<8x128xf32>
    %111 = vector.extract_strided_slice %110 {offsets = [0, 0], sizes = [8, 32], strides = [1, 1]} : vector<8x128xf32> to vector<8x32xf32>
    %112 = vector.extract_strided_slice %110 {offsets = [0, 32], sizes = [8, 32], strides = [1, 1]} : vector<8x128xf32> to vector<8x32xf32>
    %113 = vector.extract_strided_slice %110 {offsets = [0, 64], sizes = [8, 32], strides = [1, 1]} : vector<8x128xf32> to vector<8x32xf32>
    %114 = vector.extract_strided_slice %110 {offsets = [0, 96], sizes = [8, 32], strides = [1, 1]} : vector<8x128xf32> to vector<8x32xf32>
    %115 = arith.mulf %112, %82 : vector<8x32xf32>
    %116 = arith.mulf %111, %113 : vector<8x32xf32>
    %117 = arith.addf %115, %116 : vector<8x32xf32>
    %118 = math.tanh %117 : vector<8x32xf32>
    %119 = arith.mulf %114, %118 : vector<8x32xf32>
    %cst_32 = arith.constant dense<0.000000e+00> : vector<8x4xf32>
    %120 = tpu.matmul %119, %9, %cst_32 {dimension_numbers = #tpu.dot_dimension_numbers<[1], [0], [0], [1], [0, 0, 1, 1], [], []>} : vector<8x32xf32>, vector<32x4xf32>, vector<8x4xf32> -> vector<8x4xf32>
    %121 = arith.addf %120, %12 : vector<8x4xf32>
    %c2 = arith.constant 2 : index
    %c0_33 = arith.constant 0 : index
    %c0_34 = arith.constant 0 : index
    %122 = vector.load %arg9[%c2, %c0_33, %c0_34] : memref<8x8x4xf32, #tpu.memory_space<vmem>>, vector<1x8x4xf32>
    %123 = vector.shape_cast %122 : vector<1x8x4xf32> to vector<8x4xf32>
    %124 = vector.shape_cast %121 : vector<8x4xf32> to vector<1x8x4xf32>
    tpu.vector_store %arg9[%c2, %c0_33, %c0_34], %124 {strides = array<i32>} : memref<8x8x4xf32, #tpu.memory_space<vmem>>, vector<1x8x4xf32>,
    %125 = tpu.concatenate %119, %104 in 1 : vector<8x32xf32>, vector<8x32xf32> -> vector<8x64xf32>
    %cst_35 = arith.constant dense<0.000000e+00> : vector<8x128xf32>
    %126 = tpu.matmul %125, %2, %cst_35 {dimension_numbers = #tpu.dot_dimension_numbers<[1], [0], [0], [1], [0, 0, 1, 1], [], []>} : vector<8x64xf32>, vector<64x128xf32>, vector<8x128xf32> -> vector<8x128xf32>
    %127 = arith.addf %126, %1 : vector<8x128xf32>
    %128 = math.tanh %127 : vector<8x128xf32>
    %129 = arith.mulf %128, %15 : vector<8x128xf32>
    %130 = arith.addf %129, %18 : vector<8x128xf32>
    %131 = vector.extract_strided_slice %130 {offsets = [0, 0], sizes = [8, 32], strides = [1, 1]} : vector<8x128xf32> to vector<8x32xf32>
    %132 = vector.extract_strided_slice %130 {offsets = [0, 32], sizes = [8, 32], strides = [1, 1]} : vector<8x128xf32> to vector<8x32xf32>
    %133 = vector.extract_strided_slice %130 {offsets = [0, 64], sizes = [8, 32], strides = [1, 1]} : vector<8x128xf32> to vector<8x32xf32>
    %134 = vector.extract_strided_slice %130 {offsets = [0, 96], sizes = [8, 32], strides = [1, 1]} : vector<8x128xf32> to vector<8x32xf32>
    %135 = arith.mulf %132, %102 : vector<8x32xf32>
    %136 = arith.mulf %131, %133 : vector<8x32xf32>
    %137 = arith.addf %135, %136 : vector<8x32xf32>
    %138 = math.tanh %137 : vector<8x32xf32>
    %139 = arith.mulf %134, %138 : vector<8x32xf32>
    %140 = tpu.concatenate %139, %119 in 1 : vector<8x32xf32>, vector<8x32xf32> -> vector<8x64xf32>
    %cst_36 = arith.constant dense<0.000000e+00> : vector<8x128xf32>
    %141 = tpu.matmul %140, %4, %cst_36 {dimension_numbers = #tpu.dot_dimension_numbers<[1], [0], [0], [1], [0, 0, 1, 1], [], []>} : vector<8x64xf32>, vector<64x128xf32>, vector<8x128xf32> -> vector<8x128xf32>
    %142 = arith.addf %141, %8 : vector<8x128xf32>
    %143 = math.tanh %142 : vector<8x128xf32>
    %144 = arith.mulf %143, %15 : vector<8x128xf32>
    %145 = arith.addf %144, %18 : vector<8x128xf32>
    %146 = vector.extract_strided_slice %145 {offsets = [0, 0], sizes = [8, 32], strides = [1, 1]} : vector<8x128xf32> to vector<8x32xf32>
    %147 = vector.extract_strided_slice %145 {offsets = [0, 32], sizes = [8, 32], strides = [1, 1]} : vector<8x128xf32> to vector<8x32xf32>
    %148 = vector.extract_strided_slice %145 {offsets = [0, 64], sizes = [8, 32], strides = [1, 1]} : vector<8x128xf32> to vector<8x32xf32>
    %149 = vector.extract_strided_slice %145 {offsets = [0, 96], sizes = [8, 32], strides = [1, 1]} : vector<8x128xf32> to vector<8x32xf32>
    %150 = arith.mulf %147, %117 : vector<8x32xf32>
    %151 = arith.mulf %146, %148 : vector<8x32xf32>
    %152 = arith.addf %150, %151 : vector<8x32xf32>
    %153 = math.tanh %152 : vector<8x32xf32>
    %154 = arith.mulf %149, %153 : vector<8x32xf32>
    %cst_37 = arith.constant dense<0.000000e+00> : vector<8x4xf32>
    %155 = tpu.matmul %154, %9, %cst_37 {dimension_numbers = #tpu.dot_dimension_numbers<[1], [0], [0], [1], [0, 0, 1, 1], [], []>} : vector<8x32xf32>, vector<32x4xf32>, vector<8x4xf32> -> vector<8x4xf32>
    %156 = arith.addf %155, %12 : vector<8x4xf32>
    %c3 = arith.constant 3 : index
    %c0_38 = arith.constant 0 : index
    %c0_39 = arith.constant 0 : index
    %157 = vector.load %arg9[%c3, %c0_38, %c0_39] : memref<8x8x4xf32, #tpu.memory_space<vmem>>, vector<1x8x4xf32>
    %158 = vector.shape_cast %157 : vector<1x8x4xf32> to vector<8x4xf32>
    %159 = vector.shape_cast %156 : vector<8x4xf32> to vector<1x8x4xf32>
    tpu.vector_store %arg9[%c3, %c0_38, %c0_39], %159 {strides = array<i32>} : memref<8x8x4xf32, #tpu.memory_space<vmem>>, vector<1x8x4xf32>,
    %160 = tpu.concatenate %154, %139 in 1 : vector<8x32xf32>, vector<8x32xf32> -> vector<8x64xf32>
    %cst_40 = arith.constant dense<0.000000e+00> : vector<8x128xf32>
    %161 = tpu.matmul %160, %2, %cst_40 {dimension_numbers = #tpu.dot_dimension_numbers<[1], [0], [0], [1], [0, 0, 1, 1], [], []>} : vector<8x64xf32>, vector<64x128xf32>, vector<8x128xf32> -> vector<8x128xf32>
    %162 = arith.addf %161, %1 : vector<8x128xf32>
    %163 = math.tanh %162 : vector<8x128xf32>
    %164 = arith.mulf %163, %15 : vector<8x128xf32>
    %165 = arith.addf %164, %18 : vector<8x128xf32>
    %166 = vector.extract_strided_slice %165 {offsets = [0, 0], sizes = [8, 32], strides = [1, 1]} : vector<8x128xf32> to vector<8x32xf32>
    %167 = vector.extract_strided_slice %165 {offsets = [0, 32], sizes = [8, 32], strides = [1, 1]} : vector<8x128xf32> to vector<8x32xf32>
    %168 = vector.extract_strided_slice %165 {offsets = [0, 64], sizes = [8, 32], strides = [1, 1]} : vector<8x128xf32> to vector<8x32xf32>
    %169 = vector.extract_strided_slice %165 {offsets = [0, 96], sizes = [8, 32], strides = [1, 1]} : vector<8x128xf32> to vector<8x32xf32>
    %170 = arith.mulf %167, %137 : vector<8x32xf32>
    %171 = arith.mulf %166, %168 : vector<8x32xf32>
    %172 = arith.addf %170, %171 : vector<8x32xf32>
    %173 = math.tanh %172 : vector<8x32xf32>
    %174 = arith.mulf %169, %173 : vector<8x32xf32>
    %175 = tpu.concatenate %174, %154 in 1 : vector<8x32xf32>, vector<8x32xf32> -> vector<8x64xf32>
    %cst_41 = arith.constant dense<0.000000e+00> : vector<8x128xf32>
    %176 = tpu.matmul %175, %4, %cst_41 {dimension_numbers = #tpu.dot_dimension_numbers<[1], [0], [0], [1], [0, 0, 1, 1], [], []>} : vector<8x64xf32>, vector<64x128xf32>, vector<8x128xf32> -> vector<8x128xf32>
    %177 = arith.addf %176, %8 : vector<8x128xf32>
    %178 = math.tanh %177 : vector<8x128xf32>
    %179 = arith.mulf %178, %15 : vector<8x128xf32>
    %180 = arith.addf %179, %18 : vector<8x128xf32>
    %181 = vector.extract_strided_slice %180 {offsets = [0, 0], sizes = [8, 32], strides = [1, 1]} : vector<8x128xf32> to vector<8x32xf32>
    %182 = vector.extract_strided_slice %180 {offsets = [0, 32], sizes = [8, 32], strides = [1, 1]} : vector<8x128xf32> to vector<8x32xf32>
    %183 = vector.extract_strided_slice %180 {offsets = [0, 64], sizes = [8, 32], strides = [1, 1]} : vector<8x128xf32> to vector<8x32xf32>
    %184 = vector.extract_strided_slice %180 {offsets = [0, 96], sizes = [8, 32], strides = [1, 1]} : vector<8x128xf32> to vector<8x32xf32>
    %185 = arith.mulf %182, %152 : vector<8x32xf32>
    %186 = arith.mulf %181, %183 : vector<8x32xf32>
    %187 = arith.addf %185, %186 : vector<8x32xf32>
    %188 = math.tanh %187 : vector<8x32xf32>
    %189 = arith.mulf %184, %188 : vector<8x32xf32>
    %cst_42 = arith.constant dense<0.000000e+00> : vector<8x4xf32>
    %190 = tpu.matmul %189, %9, %cst_42 {dimension_numbers = #tpu.dot_dimension_numbers<[1], [0], [0], [1], [0, 0, 1, 1], [], []>} : vector<8x32xf32>, vector<32x4xf32>, vector<8x4xf32> -> vector<8x4xf32>
    %191 = arith.addf %190, %12 : vector<8x4xf32>
    %c4 = arith.constant 4 : index
    %c0_43 = arith.constant 0 : index
    %c0_44 = arith.constant 0 : index
    %192 = vector.load %arg9[%c4, %c0_43, %c0_44] : memref<8x8x4xf32, #tpu.memory_space<vmem>>, vector<1x8x4xf32>
    %193 = vector.shape_cast %192 : vector<1x8x4xf32> to vector<8x4xf32>
    %194 = vector.shape_cast %191 : vector<8x4xf32> to vector<1x8x4xf32>
    tpu.vector_store %arg9[%c4, %c0_43, %c0_44], %194 {strides = array<i32>} : memref<8x8x4xf32, #tpu.memory_space<vmem>>, vector<1x8x4xf32>,
    %195 = tpu.concatenate %189, %174 in 1 : vector<8x32xf32>, vector<8x32xf32> -> vector<8x64xf32>
    %cst_45 = arith.constant dense<0.000000e+00> : vector<8x128xf32>
    %196 = tpu.matmul %195, %2, %cst_45 {dimension_numbers = #tpu.dot_dimension_numbers<[1], [0], [0], [1], [0, 0, 1, 1], [], []>} : vector<8x64xf32>, vector<64x128xf32>, vector<8x128xf32> -> vector<8x128xf32>
    %197 = arith.addf %196, %1 : vector<8x128xf32>
    %198 = math.tanh %197 : vector<8x128xf32>
    %199 = arith.mulf %198, %15 : vector<8x128xf32>
    %200 = arith.addf %199, %18 : vector<8x128xf32>
    %201 = vector.extract_strided_slice %200 {offsets = [0, 0], sizes = [8, 32], strides = [1, 1]} : vector<8x128xf32> to vector<8x32xf32>
    %202 = vector.extract_strided_slice %200 {offsets = [0, 32], sizes = [8, 32], strides = [1, 1]} : vector<8x128xf32> to vector<8x32xf32>
    %203 = vector.extract_strided_slice %200 {offsets = [0, 64], sizes = [8, 32], strides = [1, 1]} : vector<8x128xf32> to vector<8x32xf32>
    %204 = vector.extract_strided_slice %200 {offsets = [0, 96], sizes = [8, 32], strides = [1, 1]} : vector<8x128xf32> to vector<8x32xf32>
    %205 = arith.mulf %202, %172 : vector<8x32xf32>
    %206 = arith.mulf %201, %203 : vector<8x32xf32>
    %207 = arith.addf %205, %206 : vector<8x32xf32>
    %208 = math.tanh %207 : vector<8x32xf32>
    %209 = arith.mulf %204, %208 : vector<8x32xf32>
    %210 = tpu.concatenate %209, %189 in 1 : vector<8x32xf32>, vector<8x32xf32> -> vector<8x64xf32>
    %cst_46 = arith.constant dense<0.000000e+00> : vector<8x128xf32>
    %211 = tpu.matmul %210, %4, %cst_46 {dimension_numbers = #tpu.dot_dimension_numbers<[1], [0], [0], [1], [0, 0, 1, 1], [], []>} : vector<8x64xf32>, vector<64x128xf32>, vector<8x128xf32> -> vector<8x128xf32>
    %212 = arith.addf %211, %8 : vector<8x128xf32>
    %213 = math.tanh %212 : vector<8x128xf32>
    %214 = arith.mulf %213, %15 : vector<8x128xf32>
    %215 = arith.addf %214, %18 : vector<8x128xf32>
    %216 = vector.extract_strided_slice %215 {offsets = [0, 0], sizes = [8, 32], strides = [1, 1]} : vector<8x128xf32> to vector<8x32xf32>
    %217 = vector.extract_strided_slice %215 {offsets = [0, 32], sizes = [8, 32], strides = [1, 1]} : vector<8x128xf32> to vector<8x32xf32>
    %218 = vector.extract_strided_slice %215 {offsets = [0, 64], sizes = [8, 32], strides = [1, 1]} : vector<8x128xf32> to vector<8x32xf32>
    %219 = vector.extract_strided_slice %215 {offsets = [0, 96], sizes = [8, 32], strides = [1, 1]} : vector<8x128xf32> to vector<8x32xf32>
    %220 = arith.mulf %217, %187 : vector<8x32xf32>
    %221 = arith.mulf %216, %218 : vector<8x32xf32>
    %222 = arith.addf %220, %221 : vector<8x32xf32>
    %223 = math.tanh %222 : vector<8x32xf32>
    %224 = arith.mulf %219, %223 : vector<8x32xf32>
    %cst_47 = arith.constant dense<0.000000e+00> : vector<8x4xf32>
    %225 = tpu.matmul %224, %9, %cst_47 {dimension_numbers = #tpu.dot_dimension_numbers<[1], [0], [0], [1], [0, 0, 1, 1], [], []>} : vector<8x32xf32>, vector<32x4xf32>, vector<8x4xf32> -> vector<8x4xf32>
    %226 = arith.addf %225, %12 : vector<8x4xf32>
    %c5 = arith.constant 5 : index
    %c0_48 = arith.constant 0 : index
    %c0_49 = arith.constant 0 : index
    %227 = vector.load %arg9[%c5, %c0_48, %c0_49] : memref<8x8x4xf32, #tpu.memory_space<vmem>>, vector<1x8x4xf32>
    %228 = vector.shape_cast %227 : vector<1x8x4xf32> to vector<8x4xf32>
    %229 = vector.shape_cast %226 : vector<8x4xf32> to vector<1x8x4xf32>
    tpu.vector_store %arg9[%c5, %c0_48, %c0_49], %229 {strides = array<i32>} : memref<8x8x4xf32, #tpu.memory_space<vmem>>, vector<1x8x4xf32>,
    %230 = tpu.concatenate %224, %209 in 1 : vector<8x32xf32>, vector<8x32xf32> -> vector<8x64xf32>
    %cst_50 = arith.constant dense<0.000000e+00> : vector<8x128xf32>
    %231 = tpu.matmul %230, %2, %cst_50 {dimension_numbers = #tpu.dot_dimension_numbers<[1], [0], [0], [1], [0, 0, 1, 1], [], []>} : vector<8x64xf32>, vector<64x128xf32>, vector<8x128xf32> -> vector<8x128xf32>
    %232 = arith.addf %231, %1 : vector<8x128xf32>
    %233 = math.tanh %232 : vector<8x128xf32>
    %234 = arith.mulf %233, %15 : vector<8x128xf32>
    %235 = arith.addf %234, %18 : vector<8x128xf32>
    %236 = vector.extract_strided_slice %235 {offsets = [0, 0], sizes = [8, 32], strides = [1, 1]} : vector<8x128xf32> to vector<8x32xf32>
    %237 = vector.extract_strided_slice %235 {offsets = [0, 32], sizes = [8, 32], strides = [1, 1]} : vector<8x128xf32> to vector<8x32xf32>
    %238 = vector.extract_strided_slice %235 {offsets = [0, 64], sizes = [8, 32], strides = [1, 1]} : vector<8x128xf32> to vector<8x32xf32>
    %239 = vector.extract_strided_slice %235 {offsets = [0, 96], sizes = [8, 32], strides = [1, 1]} : vector<8x128xf32> to vector<8x32xf32>
    %240 = arith.mulf %237, %207 : vector<8x32xf32>
    %241 = arith.mulf %236, %238 : vector<8x32xf32>
    %242 = arith.addf %240, %241 : vector<8x32xf32>
    %243 = math.tanh %242 : vector<8x32xf32>
    %244 = arith.mulf %239, %243 : vector<8x32xf32>
    %245 = tpu.concatenate %244, %224 in 1 : vector<8x32xf32>, vector<8x32xf32> -> vector<8x64xf32>
    %cst_51 = arith.constant dense<0.000000e+00> : vector<8x128xf32>
    %246 = tpu.matmul %245, %4, %cst_51 {dimension_numbers = #tpu.dot_dimension_numbers<[1], [0], [0], [1], [0, 0, 1, 1], [], []>} : vector<8x64xf32>, vector<64x128xf32>, vector<8x128xf32> -> vector<8x128xf32>
    %247 = arith.addf %246, %8 : vector<8x128xf32>
    %248 = math.tanh %247 : vector<8x128xf32>
    %249 = arith.mulf %248, %15 : vector<8x128xf32>
    %250 = arith.addf %249, %18 : vector<8x128xf32>
    %251 = vector.extract_strided_slice %250 {offsets = [0, 0], sizes = [8, 32], strides = [1, 1]} : vector<8x128xf32> to vector<8x32xf32>
    %252 = vector.extract_strided_slice %250 {offsets = [0, 32], sizes = [8, 32], strides = [1, 1]} : vector<8x128xf32> to vector<8x32xf32>
    %253 = vector.extract_strided_slice %250 {offsets = [0, 64], sizes = [8, 32], strides = [1, 1]} : vector<8x128xf32> to vector<8x32xf32>
    %254 = vector.extract_strided_slice %250 {offsets = [0, 96], sizes = [8, 32], strides = [1, 1]} : vector<8x128xf32> to vector<8x32xf32>
    %255 = arith.mulf %252, %222 : vector<8x32xf32>
    %256 = arith.mulf %251, %253 : vector<8x32xf32>
    %257 = arith.addf %255, %256 : vector<8x32xf32>
    %258 = math.tanh %257 : vector<8x32xf32>
    %259 = arith.mulf %254, %258 : vector<8x32xf32>
    %cst_52 = arith.constant dense<0.000000e+00> : vector<8x4xf32>
    %260 = tpu.matmul %259, %9, %cst_52 {dimension_numbers = #tpu.dot_dimension_numbers<[1], [0], [0], [1], [0, 0, 1, 1], [], []>} : vector<8x32xf32>, vector<32x4xf32>, vector<8x4xf32> -> vector<8x4xf32>
    %261 = arith.addf %260, %12 : vector<8x4xf32>
    %c6 = arith.constant 6 : index
    %c0_53 = arith.constant 0 : index
    %c0_54 = arith.constant 0 : index
    %262 = vector.load %arg9[%c6, %c0_53, %c0_54] : memref<8x8x4xf32, #tpu.memory_space<vmem>>, vector<1x8x4xf32>
    %263 = vector.shape_cast %262 : vector<1x8x4xf32> to vector<8x4xf32>
    %264 = vector.shape_cast %261 : vector<8x4xf32> to vector<1x8x4xf32>
    tpu.vector_store %arg9[%c6, %c0_53, %c0_54], %264 {strides = array<i32>} : memref<8x8x4xf32, #tpu.memory_space<vmem>>, vector<1x8x4xf32>,
    %265 = tpu.concatenate %259, %244 in 1 : vector<8x32xf32>, vector<8x32xf32> -> vector<8x64xf32>
    %cst_55 = arith.constant dense<0.000000e+00> : vector<8x128xf32>
    %266 = tpu.matmul %265, %2, %cst_55 {dimension_numbers = #tpu.dot_dimension_numbers<[1], [0], [0], [1], [0, 0, 1, 1], [], []>} : vector<8x64xf32>, vector<64x128xf32>, vector<8x128xf32> -> vector<8x128xf32>
    %267 = arith.addf %266, %1 : vector<8x128xf32>
    %268 = math.tanh %267 : vector<8x128xf32>
    %269 = arith.mulf %268, %15 : vector<8x128xf32>
    %270 = arith.addf %269, %18 : vector<8x128xf32>
    %271 = vector.extract_strided_slice %270 {offsets = [0, 0], sizes = [8, 32], strides = [1, 1]} : vector<8x128xf32> to vector<8x32xf32>
    %272 = vector.extract_strided_slice %270 {offsets = [0, 32], sizes = [8, 32], strides = [1, 1]} : vector<8x128xf32> to vector<8x32xf32>
    %273 = vector.extract_strided_slice %270 {offsets = [0, 64], sizes = [8, 32], strides = [1, 1]} : vector<8x128xf32> to vector<8x32xf32>
    %274 = vector.extract_strided_slice %270 {offsets = [0, 96], sizes = [8, 32], strides = [1, 1]} : vector<8x128xf32> to vector<8x32xf32>
    %275 = arith.mulf %272, %242 : vector<8x32xf32>
    %276 = arith.mulf %271, %273 : vector<8x32xf32>
    %277 = arith.addf %275, %276 : vector<8x32xf32>
    %278 = math.tanh %277 : vector<8x32xf32>
    %279 = arith.mulf %274, %278 : vector<8x32xf32>
    %280 = tpu.concatenate %279, %259 in 1 : vector<8x32xf32>, vector<8x32xf32> -> vector<8x64xf32>
    %cst_56 = arith.constant dense<0.000000e+00> : vector<8x128xf32>
    %281 = tpu.matmul %280, %4, %cst_56 {dimension_numbers = #tpu.dot_dimension_numbers<[1], [0], [0], [1], [0, 0, 1, 1], [], []>} : vector<8x64xf32>, vector<64x128xf32>, vector<8x128xf32> -> vector<8x128xf32>
    %282 = arith.addf %281, %8 : vector<8x128xf32>
    %283 = math.tanh %282 : vector<8x128xf32>
    %284 = arith.mulf %283, %15 : vector<8x128xf32>
    %285 = arith.addf %284, %18 : vector<8x128xf32>
    %286 = vector.extract_strided_slice %285 {offsets = [0, 0], sizes = [8, 32], strides = [1, 1]} : vector<8x128xf32> to vector<8x32xf32>
    %287 = vector.extract_strided_slice %285 {offsets = [0, 32], sizes = [8, 32], strides = [1, 1]} : vector<8x128xf32> to vector<8x32xf32>
    %288 = vector.extract_strided_slice %285 {offsets = [0, 64], sizes = [8, 32], strides = [1, 1]} : vector<8x128xf32> to vector<8x32xf32>
    %289 = vector.extract_strided_slice %285 {offsets = [0, 96], sizes = [8, 32], strides = [1, 1]} : vector<8x128xf32> to vector<8x32xf32>
    %290 = arith.mulf %287, %257 : vector<8x32xf32>
    %291 = arith.mulf %286, %288 : vector<8x32xf32>
    %292 = arith.addf %290, %291 : vector<8x32xf32>
    %293 = math.tanh %292 : vector<8x32xf32>
    %294 = arith.mulf %289, %293 : vector<8x32xf32>
    %cst_57 = arith.constant dense<0.000000e+00> : vector<8x4xf32>
    %295 = tpu.matmul %294, %9, %cst_57 {dimension_numbers = #tpu.dot_dimension_numbers<[1], [0], [0], [1], [0, 0, 1, 1], [], []>} : vector<8x32xf32>, vector<32x4xf32>, vector<8x4xf32> -> vector<8x4xf32>
    %296 = arith.addf %295, %12 : vector<8x4xf32>
    %c7 = arith.constant 7 : index
    %c0_58 = arith.constant 0 : index
    %c0_59 = arith.constant 0 : index
    %297 = vector.load %arg9[%c7, %c0_58, %c0_59] : memref<8x8x4xf32, #tpu.memory_space<vmem>>, vector<1x8x4xf32>
    %298 = vector.shape_cast %297 : vector<1x8x4xf32> to vector<8x4xf32>
    %299 = vector.shape_cast %296 : vector<8x4xf32> to vector<1x8x4xf32>
    tpu.vector_store %arg9[%c7, %c0_58, %c0_59], %299 {strides = array<i32>} : memref<8x8x4xf32, #tpu.memory_space<vmem>>, vector<1x8x4xf32>,
    return
  }
}

</mosaic_0001>

<llo_original>
// kernel: tpu_custom_call.1
$region0: #{tpu_custom_call.1}
  #allocation0 [shape = 'u32[]', space=smem, size = 0x4, offset = 0x4, fixed_abs, tag = 'smem constant byte address 0x4 - core index']
  #allocation1 [shape = 'u32[144,128]{1,0:T(1,128)}', space=vmem, size = 0x12000, scoped, tag = 'internal scratch']
  %s0 = inlined_call_operand.vmem [shape: f32[8,128], index: 0, kind: input, shape index: {}]
  %s1 = inlined_call_operand.vmem [shape: f32[8,128], index: 1, kind: input, shape index: {}]
  %s2 = inlined_call_operand.hbm [shape: f32[64,128], index: 2, kind: input, shape index: {}]
  %s3 = inlined_call_operand.hbm [shape: f32[1,64,128], index: 3, kind: input, shape index: {}]
  %s4 = inlined_call_operand.vmem [shape: f32[1,1,128], index: 4, kind: input, shape index: {}]
  %s5 = inlined_call_operand.vmem [shape: f32[32,4], index: 5, kind: input, shape index: {}]
  %s6 = inlined_call_operand.vmem [shape: f32[1,4], index: 6, kind: input, shape index: {}]
  %s7 = inlined_call_operand.vmem [shape: f32[1,128], index: 7, kind: input, shape index: {}]
  %s8 = inlined_call_operand.vmem [shape: f32[1,128], index: 8, kind: input, shape index: {}]
  %s9 = inlined_call_operand.vmem [shape: f32[8,8,4], index: 9, kind: output, shape index: {}]
  %s10 = sld [smem:[#allocation0]]
  $region54: #{tpu_custom_call.1} parent=0
    _
  %s12 = ssub.s32 1, %s10
  %s13 = scalar_select 0, %s12, %s10
  $region1: #{tpu_custom_call.1} parent=0
    #allocation2 [shape = 'u8[32768]{0}', space=vmem, size = 0x8000, scoped, tag = 'input window, operand 2, single buffered']
    #allocation3 [shape = 's32[1]{0}', space=sflag, size = 0x4, scoped, tag = 'scoped memory for tpu_custom_call.1']
    #allocation4 [shape = 'u8[32768]{0}', space=vmem, size = 0x8000, scoped, tag = 'input window, operand 3, single buffered']
    #allocation5 [shape = 's32[1]{0}', space=sflag, size = 0x4, scoped, tag = 'scoped memory for tpu_custom_call.1']
    %14 = vsyncpa [#allocation3], 0
    %15 = vsyncpa [#allocation5], 0
    // Predicated region
    $region2: #{tpu_custom_call.1} parent=1 // pred_check
      _
    $region3: #{tpu_custom_call.1} parent=1 // pred_check_branch
      %17 = sbr.rel (0) target = $region5
    $region4: #{tpu_custom_call.1} parent=1 // pred_region
      _
    $region5: #{tpu_custom_call.1} parent=1 // pred_fallthru
      _
    // Predicated region
    $region6: #{tpu_custom_call.1} parent=1 // pred_check
      _
    $region7: #{tpu_custom_call.1} parent=1 // pred_check_branch
      %19 = sbr.rel (0) target = $region9
    $region8: #{tpu_custom_call.1} parent=1 // pred_region
      _
    $region9: #{tpu_custom_call.1} parent=1 // pred_fallthru
      _
    // Predicated region
    $region10: #{tpu_custom_call.1} parent=1 // pred_check
      _
    $region11: #{tpu_custom_call.1} parent=1 // pred_check_branch
      %21 = sbr.rel (0) target = $region13
    $region12: #{tpu_custom_call.1} parent=1 // pred_region
      %s23 = ssub.s32 1024, 1024
      %24 = vsyncadd [#allocation3], %s23
      %s25 = sshll.u32 [#allocation2], 4
      %s26 = int_to_ptr.vmem [resolvable:$true] %s25
      %31 = dma.hbm_to_vmem [thread:$0]  %s2, 1024, %s26, [#allocation3], 128, 128, 8
    $region13: #{tpu_custom_call.1} parent=1 // pred_fallthru
      _
    // Predicated region
    $region14: #{tpu_custom_call.1} parent=1 // pred_check
      _
    $region15: #{tpu_custom_call.1} parent=1 // pred_check_branch
      %33 = sbr.rel (0) target = $region17
    $region16: #{tpu_custom_call.1} parent=1 // pred_region
      %s35 = ssub.s32 1024, 1024
      %36 = vsyncadd [#allocation5], %s35
      %s37 = sshll.u32 [#allocation4], 4
      %s38 = int_to_ptr.vmem [resolvable:$true] %s37
      %43 = dma.hbm_to_vmem [thread:$0]  %s3, 1024, %s38, [#allocation5], 128, 128, 8
    $region17: #{tpu_custom_call.1} parent=1 // pred_fallthru
      _
    // Predicated region
    $region18: #{tpu_custom_call.1} parent=1 // pred_check
      _
    $region19: #{tpu_custom_call.1} parent=1 // pred_check_branch
      %45 = sbr.rel (0) target = $region21
    $region20: #{tpu_custom_call.1} parent=1 // pred_region
      _
    $region21: #{tpu_custom_call.1} parent=1 // pred_fallthru
      _
    // Predicated region
    $region22: #{tpu_custom_call.1} parent=1 // pred_check
      _
    $region23: #{tpu_custom_call.1} parent=1 // pred_check_branch
      %47 = sbr.rel (0) target = $region25
    $region24: #{tpu_custom_call.1} parent=1 // pred_region
      _
    $region25: #{tpu_custom_call.1} parent=1 // pred_fallthru
      _
    // Predicated region
    $region26: #{tpu_custom_call.1} parent=1 // pred_check
      _
    $region27: #{tpu_custom_call.1} parent=1 // pred_check_branch
      %49 = sbr.rel (0) target = $region29
    $region28: #{tpu_custom_call.1} parent=1 // pred_region
      _
    $region29: #{tpu_custom_call.1} parent=1 // pred_fallthru
      _
    // Predicated region
    $region30: #{tpu_custom_call.1} parent=1 // pred_check
      _
    $region31: #{tpu_custom_call.1} parent=1 // pred_check_branch
      %51 = sbr.rel (0) target = $region33
    $region32: #{tpu_custom_call.1} parent=1 // pred_region
      _
    $region33: #{tpu_custom_call.1} parent=1 // pred_fallthru
      _
    // Predicated region
    $region34: #{tpu_custom_call.1} parent=1 // pred_check
      _
    $region35: #{tpu_custom_call.1} parent=1 // pred_check_branch
      %53 = sbr.rel (0) target = $region37
    $region36: #{tpu_custom_call.1} parent=1 // pred_region
      _
    $region37: #{tpu_custom_call.1} parent=1 // pred_fallthru
      _
    // Predicated region
    $region38: #{tpu_custom_call.1} parent=1 // pred_check
      _
    $region39: #{tpu_custom_call.1} parent=1 // pred_check_branch
      %55 = sbr.rel (0) target = $region41
    $region40: #{tpu_custom_call.1} parent=1 // pred_region
      %56 = dma.done [#allocation3], 1024
    $region41: #{tpu_custom_call.1} parent=1 // pred_fallthru
      _
    // Predicated region
    $region42: #{tpu_custom_call.1} parent=1 // pred_check
      _
    $region43: #{tpu_custom_call.1} parent=1 // pred_check_branch
      %58 = sbr.rel (0) target = $region45
    $region44: #{tpu_custom_call.1} parent=1 // pred_region
      %59 = dma.done [#allocation5], 1024
    $region45: #{tpu_custom_call.1} parent=1 // pred_fallthru
      _
    %v60 = vld [vmem:[%s0] sm:$0xff]
    %v61 = vld [vmem:[%s1] sm:$0xff]
    %v62 = vld [vmem:[#allocation2] sm:$0xff]
    %v63 = vld [vmem:[#allocation2 + $0x8] sm:$0xff]
    %v64 = vld [vmem:[#allocation2 + $0x10] sm:$0xff]
    %v65 = vld [vmem:[#allocation2 + $0x18] sm:$0xff]
    %v66 = vld [vmem:[#allocation2 + $0x20] sm:$0xff]
    %v67 = vld [vmem:[#allocation2 + $0x28] sm:$0xff]
    %v68 = vld [vmem:[#allocation2 + $0x30] sm:$0xff]
    %v69 = vld [vmem:[#allocation2 + $0x38] sm:$0xff]
    %v70 = vld [vmem:[#allocation4] sm:$0xff]
    %v71 = vld [vmem:[#allocation4 + $0x8] sm:$0xff]
    %v72 = vld [vmem:[#allocation4 + $0x10] sm:$0xff]
    %v73 = vld [vmem:[#allocation4 + $0x18] sm:$0xff]
    %v74 = vld [vmem:[#allocation4 + $0x20] sm:$0xff]
    %v75 = vld [vmem:[#allocation4 + $0x28] sm:$0xff]
    %v76 = vld [vmem:[#allocation4 + $0x30] sm:$0xff]
    %v77 = vld [vmem:[#allocation4 + $0x38] sm:$0xff]
    %v78 = vld [vmem:[%s4] sm:$0x1]
    %v80 = vlaneseq
    %v81 = vshrl.u32 %v80, 7
    %v82 = vsub.s32 0, %v81
    %v83 = vrot.slane %v78, %v82
    %v85 = vld [vmem:[%s5] sm:$0xff]
    %v86 = vld [vmem:[%s5 + $0x8] sm:$0xff]
    %v87 = vld [vmem:[%s5 + $0x10] sm:$0xff]
    %v88 = vld [vmem:[%s5 + $0x18] sm:$0xff]
    %v89 = vld [vmem:[%s6] sm:$0x1]
    %v91 = vlaneseq
    %v92 = vshrl.u32 %v91, 7
    %v93 = vsub.s32 0, %v92
    %v94 = vrot.slane %v89, %v93
    %v96 = vld [vmem:[%s7] sm:$0x1]
    %v98 = vlaneseq
    %v99 = vshrl.u32 %v98, 7
    %v100 = vsub.s32 0, %v99
    %v101 = vrot.slane %v96, %v100
    %v103 = vld [vmem:[%s8] sm:$0x1]
    %v105 = vlaneseq
    %v106 = vshrl.u32 %v105, 7
    %v107 = vsub.s32 0, %v106
    %v108 = vrot.slane %v103, %v107
    %vm110 = vcmask 523264
    %v112 = vsel %vm110, 0.0, 0
    %114 = vmatprep.subr.mxu0 0.0
    %115 = vmatpush1.msra.mxu0 0.0
    %116 = vmatprep.subr.mxu0 0.0
    %117 = vmatpush1.msra.mxu0 0.0
    %118 = vmatprep.subr.mxu0 0.0
    %119 = vmatpush1.msra.mxu0 0.0
    %120 = vmatprep.subr.mxu0 0.0
    %121 = vmatpush1.msra.mxu0 0.0
    %122 = vmatprep.subr.mxu0 0.0
    %123 = vmatpush1.msra.mxu0 0.0
    %124 = vmatprep.subr.mxu0 0.0
    %125 = vmatpush1.msra.mxu0 0.0
    %126 = vmatprep.subr.mxu0 0.0
    %127 = vmatpush1.msra.mxu0 0.0
    %128 = vmatprep.subr.mxu0 0.0
    %129 = vmatpush1.msra.mxu0 0.0
    %130 = vmatprep.subr.mxu0 0.0
    %131 = vmatpush1.msra.mxu0 %v69
    %132 = vmatprep.subr.mxu0 0.0
    %133 = vmatpush1.msra.mxu0 %v68
    %134 = vmatprep.subr.mxu0 0.0
    %135 = vmatpush1.msra.mxu0 %v67
    %136 = vmatprep.subr.mxu0 0.0
    %137 = vmatpush1.msra.mxu0 %v66
    %138 = vmatprep.subr.mxu0 0.0
    %139 = vmatpush1.msra.mxu0 %v65
    %140 = vmatprep.subr.mxu0 0.0
    %141 = vmatpush1.msra.mxu0 %v64
    %142 = vmatprep.subr.mxu0 0.0
    %143 = vmatpush1.msra.mxu0 %v63
    %144 = vmatprep.subr.mxu0 0.0
    %145 = vmatpush1.msra.mxu0 %v62
    %146 = vmatprep.subr.mxu0 0.0
    %147 = vmatpush2.msra.mxu0 0.0
    %148 = vmatprep.subr.mxu0 0.0
    %149 = vmatpush2.msra.mxu0 0.0
    %150 = vmatprep.subr.mxu0 0.0
    %151 = vmatpush2.msra.mxu0 0.0
    %152 = vmatprep.subr.mxu0 0.0
    %153 = vmatpush2.msra.mxu0 0.0
    %154 = vmatprep.subr.mxu0 0.0
    %155 = vmatpush2.msra.mxu0 0.0
    %156 = vmatprep.subr.mxu0 0.0
    %157 = vmatpush2.msra.mxu0 0.0
    %158 = vmatprep.subr.mxu0 0.0
    %159 = vmatpush2.msra.mxu0 0.0
    %160 = vmatprep.subr.mxu0 0.0
    %161 = vmatpush2.msra.mxu0 0.0
    %162 = vmatprep.subr.mxu0 0.0
    %163 = vmatpush2.msra.mxu0 0.0
    %164 = vmatprep.subr.mxu0 0.0
    %165 = vmatpush2.msra.mxu0 0.0
    %166 = vmatprep.subr.mxu0 0.0
    %167 = vmatpush2.msra.mxu0 0.0
    %168 = vmatprep.subr.mxu0 0.0
    %169 = vmatpush2.msra.mxu0 0.0
    %170 = vmatprep.subr.mxu0 0.0
    %171 = vmatpush2.msra.mxu0 0.0
    %172 = vmatprep.subr.mxu0 0.0
    %173 = vmatpush2.msra.mxu0 0.0
    %174 = vmatprep.subr.mxu0 0.0
    %175 = vmatpush2.msra.mxu0 0.0
    %176 = vmatprep.subr.mxu0 0.0
    %177 = vmatpush2.msra.mxu0 0.0
    %178 = vmatprep.mubr.f32.mxu0 0.0
    %179 = vmatmul.mubr.f32.gmra.mxu0 %v112
    %v180 = vpop.f32.mrf.mxu0
    %v181 = vadd.f32 %v60, %v180
    %v182 = vpop.f32.mrf.mxu0
    %183 = vdwg.mxu0
    %v184 = vtanh.pop %v181
    %v185 = vmul.f32 %v184, %v101
    %v186 = vadd.f32 %v185, %v108
    %v187 = vmul.f32 %v186, 0.0
    %189 = vrot.lane.b32.xlu0 %v186, 64
    %v190 = vpop.permute.xlu0 %189
    %v192 = vmul.f32 %v186, %v190
    %194 = vrot.lane.b32.xlu0 %v192, 32
    %v195 = vpop.permute.xlu0 %194
    %v197 = vadd.f32 %v187, %v195
    %v198 = vtanh.pop %v197
    %200 = vrot.lane.b32.xlu0 %v198, 64
    %v201 = vpop.permute.xlu0 %200
    %v203 = vmul.f32 %v186, %v201
    %205 = vrot.lane.b32.xlu0 %v203, 32
    %v206 = vpop.permute.xlu0 %205
    %vm208 = vcmask 261120
    %v209 = vsel %vm208, %v206, 0.0
    %v211 = vsel %vm110, %v209, 0
    %213 = vmatprep.subr.mxu0 0.0
    %214 = vmatpush1.msra.mxu0 0.0
    %215 = vmatprep.subr.mxu0 0.0
    %216 = vmatpush1.msra.mxu0 0.0
    %217 = vmatprep.subr.mxu0 0.0
    %218 = vmatpush1.msra.mxu0 0.0
    %219 = vmatprep.subr.mxu0 0.0
    %220 = vmatpush1.msra.mxu0 0.0
    %221 = vmatprep.subr.mxu0 0.0
    %222 = vmatpush1.msra.mxu0 0.0
    %223 = vmatprep.subr.mxu0 0.0
    %224 = vmatpush1.msra.mxu0 0.0
    %225 = vmatprep.subr.mxu0 0.0
    %226 = vmatpush1.msra.mxu0 0.0
    %227 = vmatprep.subr.mxu0 0.0
    %228 = vmatpush1.msra.mxu0 0.0
    %229 = vmatprep.subr.mxu0 0.0
    %230 = vmatpush1.msra.mxu0 %v77
    %231 = vmatprep.subr.mxu0 0.0
    %232 = vmatpush1.msra.mxu0 %v76
    %233 = vmatprep.subr.mxu0 0.0
    %234 = vmatpush1.msra.mxu0 %v75
    %235 = vmatprep.subr.mxu0 0.0
    %236 = vmatpush1.msra.mxu0 %v74
    %237 = vmatprep.subr.mxu0 0.0
    %238 = vmatpush1.msra.mxu0 %v73
    %239 = vmatprep.subr.mxu0 0.0
    %240 = vmatpush1.msra.mxu0 %v72
    %241 = vmatprep.subr.mxu0 0.0
    %242 = vmatpush1.msra.mxu0 %v71
    %243 = vmatprep.subr.mxu0 0.0
    %244 = vmatpush1.msra.mxu0 %v70
    %245 = vmatprep.subr.mxu0 0.0
    %246 = vmatpush2.msra.mxu0 0.0
    %247 = vmatprep.subr.mxu0 0.0
    %248 = vmatpush2.msra.mxu0 0.0
    %249 = vmatprep.subr.mxu0 0.0
    %250 = vmatpush2.msra.mxu0 0.0
    %251 = vmatprep.subr.mxu0 0.0
    %252 = vmatpush2.msra.mxu0 0.0
    %253 = vmatprep.subr.mxu0 0.0
    %254 = vmatpush2.msra.mxu0 0.0
    %255 = vmatprep.subr.mxu0 0.0
    %256 = vmatpush2.msra.mxu0 0.0
    %257 = vmatprep.subr.mxu0 0.0
    %258 = vmatpush2.msra.mxu0 0.0
    %259 = vmatprep.subr.mxu0 0.0
    %260 = vmatpush2.msra.mxu0 0.0
    %261 = vmatprep.subr.mxu0 0.0
    %262 = vmatpush2.msra.mxu0 0.0
    %263 = vmatprep.subr.mxu0 0.0
    %264 = vmatpush2.msra.mxu0 0.0
    %265 = vmatprep.subr.mxu0 0.0
    %266 = vmatpush2.msra.mxu0 0.0
    %267 = vmatprep.subr.mxu0 0.0
    %268 = vmatpush2.msra.mxu0 0.0
    %269 = vmatprep.subr.mxu0 0.0
    %270 = vmatpush2.msra.mxu0 0.0
    %271 = vmatprep.subr.mxu0 0.0
    %272 = vmatpush2.msra.mxu0 0.0
    %273 = vmatprep.subr.mxu0 0.0
    %274 = vmatpush2.msra.mxu0 0.0
    %275 = vmatprep.subr.mxu0 0.0
    %276 = vmatpush2.msra.mxu0 0.0
    %277 = vmatprep.mubr.f32.mxu0 0.0
    %278 = vmatmul.mubr.f32.gmra.mxu0 %v211
    %v279 = vpop.f32.mrf.mxu0
    %v280 = vadd.f32 %v83, %v279
    %v281 = vpop.f32.mrf.mxu0
    %282 = vdwg.mxu0
    %v283 = vtanh.pop %v280
    %v284 = vmul.f32 %v283, %v101
    %v285 = vadd.f32 %v284, %v108
    %v286 = vmul.f32 %v285, 0.0
    %288 = vrot.lane.b32.xlu0 %v285, 64
    %v289 = vpop.permute.xlu0 %288
    %v291 = vmul.f32 %v285, %v289
    %293 = vrot.lane.b32.xlu0 %v291, 32
    %v294 = vpop.permute.xlu0 %293
    %v296 = vadd.f32 %v286, %v294
    %v297 = vtanh.pop %v296
    %299 = vrot.lane.b32.xlu0 %v297, 64
    %v300 = vpop.permute.xlu0 %299
    %v302 = vmul.f32 %v285, %v300
    %304 = vrot.lane.b32.xlu0 %v302, 32
    %v305 = vpop.permute.xlu0 %304
    %v306 = vsel %vm208, %v305, 0
    %308 = vmatprep.subr.mxu0 0.0
    %309 = vmatpush1.msra.mxu0 0.0
    %310 = vmatprep.subr.mxu0 0.0
    %311 = vmatpush1.msra.mxu0 0.0
    %312 = vmatprep.subr.mxu0 0.0
    %313 = vmatpush1.msra.mxu0 0.0
    %314 = vmatprep.subr.mxu0 0.0
    %315 = vmatpush1.msra.mxu0 0.0
    %316 = vmatprep.subr.mxu0 0.0
    %317 = vmatpush1.msra.mxu0 0.0
    %318 = vmatprep.subr.mxu0 0.0
    %319 = vmatpush1.msra.mxu0 0.0
    %320 = vmatprep.subr.mxu0 0.0
    %321 = vmatpush1.msra.mxu0 0.0
    %322 = vmatprep.subr.mxu0 0.0
    %323 = vmatpush1.msra.mxu0 0.0
    %324 = vmatprep.subr.mxu0 0.0
    %325 = vmatpush1.msra.mxu0 0.0
    %326 = vmatprep.subr.mxu0 0.0
    %327 = vmatpush1.msra.mxu0 0.0
    %328 = vmatprep.subr.mxu0 0.0
    %329 = vmatpush1.msra.mxu0 0.0
    %330 = vmatprep.subr.mxu0 0.0
    %331 = vmatpush1.msra.mxu0 0.0
    %332 = vmatprep.subr.mxu0 0.0
    %333 = vmatpush1.msra.mxu0 %v88
    %334 = vmatprep.subr.mxu0 0.0
    %335 = vmatpush1.msra.mxu0 %v87
    %336 = vmatprep.subr.mxu0 0.0
    %337 = vmatpush1.msra.mxu0 %v86
    %338 = vmatprep.subr.mxu0 0.0
    %339 = vmatpush1.msra.mxu0 %v85
    %340 = vmatprep.subr.mxu0 0.0
    %341 = vmatpush2.msra.mxu0 0.0
    %342 = vmatprep.subr.mxu0 0.0
    %343 = vmatpush2.msra.mxu0 0.0
    %344 = vmatprep.subr.mxu0 0.0
    %345 = vmatpush2.msra.mxu0 0.0
    %346 = vmatprep.subr.mxu0 0.0
    %347 = vmatpush2.msra.mxu0 0.0
    %348 = vmatprep.subr.mxu0 0.0
    %349 = vmatpush2.msra.mxu0 0.0
    %350 = vmatprep.subr.mxu0 0.0
    %351 = vmatpush2.msra.mxu0 0.0
    %352 = vmatprep.subr.mxu0 0.0
    %353 = vmatpush2.msra.mxu0 0.0
    %354 = vmatprep.subr.mxu0 0.0
    %355 = vmatpush2.msra.mxu0 0.0
    %356 = vmatprep.subr.mxu0 0.0
    %357 = vmatpush2.msra.mxu0 0.0
    %358 = vmatprep.subr.mxu0 0.0
    %359 = vmatpush2.msra.mxu0 0.0
    %360 = vmatprep.subr.mxu0 0.0
    %361 = vmatpush2.msra.mxu0 0.0
    %362 = vmatprep.subr.mxu0 0.0
    %363 = vmatpush2.msra.mxu0 0.0
    %364 = vmatprep.subr.mxu0 0.0
    %365 = vmatpush2.msra.mxu0 0.0
    %366 = vmatprep.subr.mxu0 0.0
    %367 = vmatpush2.msra.mxu0 0.0
    %368 = vmatprep.subr.mxu0 0.0
    %369 = vmatpush2.msra.mxu0 0.0
    %370 = vmatprep.subr.mxu0 0.0
    %371 = vmatpush2.msra.mxu0 0.0
    %372 = vmatprep.mubr.f32.mxu0 0.0
    %373 = vmatmul.mubr.f32.gmra.mxu0 %v306
    %v374 = vpop.f32.mrf.mxu0
    %v375 = vadd.f32 %v94, %v374
    %v376 = vpop.f32.mrf.mxu0
    %377 = vdwg.mxu0
    %vm378 = vcmask 31744
    %379 = vst.msk [vmem:[%s9] sm:$0xff] %vm378, %v375
    %381 = vrot.lane.b32.xlu0 %v203, 64
    %v382 = vpop.permute.xlu0 %381
    %v384 = vsel %vm208, %v305, %v382
    %v386 = vsel %vm110, %v384, 0
    %388 = vmatprep.subr.mxu0 0.0
    %389 = vmatpush1.msra.mxu0 0.0
    %390 = vmatprep.subr.mxu0 0.0
    %391 = vmatpush1.msra.mxu0 0.0
    %392 = vmatprep.subr.mxu0 0.0
    %393 = vmatpush1.msra.mxu0 0.0
    %394 = vmatprep.subr.mxu0 0.0
    %395 = vmatpush1.msra.mxu0 0.0
    %396 = vmatprep.subr.mxu0 0.0
    %397 = vmatpush1.msra.mxu0 0.0
    %398 = vmatprep.subr.mxu0 0.0
    %399 = vmatpush1.msra.mxu0 0.0
    %400 = vmatprep.subr.mxu0 0.0
    %401 = vmatpush1.msra.mxu0 0.0
    %402 = vmatprep.subr.mxu0 0.0
    %403 = vmatpush1.msra.mxu0 0.0
    %404 = vmatprep.subr.mxu0 0.0
    %405 = vmatpush1.msra.mxu0 %v69
    %406 = vmatprep.subr.mxu0 0.0
    %407 = vmatpush1.msra.mxu0 %v68
    %408 = vmatprep.subr.mxu0 0.0
    %409 = vmatpush1.msra.mxu0 %v67
    %410 = vmatprep.subr.mxu0 0.0
    %411 = vmatpush1.msra.mxu0 %v66
    %412 = vmatprep.subr.mxu0 0.0
    %413 = vmatpush1.msra.mxu0 %v65
    %414 = vmatprep.subr.mxu0 0.0
    %415 = vmatpush1.msra.mxu0 %v64
    %416 = vmatprep.subr.mxu0 0.0
    %417 = vmatpush1.msra.mxu0 %v63
    %418 = vmatprep.subr.mxu0 0.0
    %419 = vmatpush1.msra.mxu0 %v62
    %420 = vmatprep.subr.mxu0 0.0
    %421 = vmatpush2.msra.mxu0 0.0
    %422 = vmatprep.subr.mxu0 0.0
    %423 = vmatpush2.msra.mxu0 0.0
    %424 = vmatprep.subr.mxu0 0.0
    %425 = vmatpush2.msra.mxu0 0.0
    %426 = vmatprep.subr.mxu0 0.0
    %427 = vmatpush2.msra.mxu0 0.0
    %428 = vmatprep.subr.mxu0 0.0
    %429 = vmatpush2.msra.mxu0 0.0
    %430 = vmatprep.subr.mxu0 0.0
    %431 = vmatpush2.msra.mxu0 0.0
    %432 = vmatprep.subr.mxu0 0.0
    %433 = vmatpush2.msra.mxu0 0.0
    %434 = vmatprep.subr.mxu0 0.0
    %435 = vmatpush2.msra.mxu0 0.0
    %436 = vmatprep.subr.mxu0 0.0
    %437 = vmatpush2.msra.mxu0 0.0
    %438 = vmatprep.subr.mxu0 0.0
    %439 = vmatpush2.msra.mxu0 0.0
    %440 = vmatprep.subr.mxu0 0.0
    %441 = vmatpush2.msra.mxu0 0.0
    %442 = vmatprep.subr.mxu0 0.0
    %443 = vmatpush2.msra.mxu0 0.0
    %444 = vmatprep.subr.mxu0 0.0
    %445 = vmatpush2.msra.mxu0 0.0
    %446 = vmatprep.subr.mxu0 0.0
    %447 = vmatpush2.msra.mxu0 0.0
    %448 = vmatprep.subr.mxu0 0.0
    %449 = vmatpush2.msra.mxu0 0.0
    %450 = vmatprep.subr.mxu0 0.0
    %451 = vmatpush2.msra.mxu0 0.0
    %452 = vmatprep.mubr.f32.mxu0 0.0
    %453 = vmatmul.mubr.f32.gmra.mxu0 %v386
    %v454 = vpop.f32.mrf.mxu0
    %v455 = vadd.f32 %v61, %v454
    %v456 = vpop.f32.mrf.mxu0
    %457 = vdwg.mxu0
    %v458 = vtanh.pop %v455
    %v459 = vmul.f32 %v458, %v101
    %v460 = vadd.f32 %v459, %v108
    %v461 = vmul.f32 %v460, %v197
    %463 = vrot.lane.b32.xlu0 %v460, 64
    %v464 = vpop.permute.xlu0 %463
    %v466 = vmul.f32 %v460, %v464
    %468 = vrot.lane.b32.xlu0 %v466, 32
    %v469 = vpop.permute.xlu0 %468
    %v471 = vadd.f32 %v461, %v469
    %v472 = vtanh.pop %v471
    %474 = vrot.lane.b32.xlu0 %v472, 64
    %v475 = vpop.permute.xlu0 %474
    %v477 = vmul.f32 %v460, %v475
    %479 = vrot.lane.b32.xlu0 %v477, 32
    %v480 = vpop.permute.xlu0 %479
    %482 = vrot.lane.b32.xlu0 %v302, 64
    %v483 = vpop.permute.xlu0 %482
    %v485 = vsel %vm208, %v480, %v483
    %v487 = vsel %vm110, %v485, 0
    %489 = vmatprep.subr.mxu0 0.0
    %490 = vmatpush1.msra.mxu0 0.0
    %491 = vmatprep.subr.mxu0 0.0
    %492 = vmatpush1.msra.mxu0 0.0
    %493 = vmatprep.subr.mxu0 0.0
    %494 = vmatpush1.msra.mxu0 0.0
    %495 = vmatprep.subr.mxu0 0.0
    %496 = vmatpush1.msra.mxu0 0.0
    %497 = vmatprep.subr.mxu0 0.0
    %498 = vmatpush1.msra.mxu0 0.0
    %499 = vmatprep.subr.mxu0 0.0
    %500 = vmatpush1.msra.mxu0 0.0
    %501 = vmatprep.subr.mxu0 0.0
    %502 = vmatpush1.msra.mxu0 0.0
    %503 = vmatprep.subr.mxu0 0.0
    %504 = vmatpush1.msra.mxu0 0.0
    %505 = vmatprep.subr.mxu0 0.0
    %506 = vmatpush1.msra.mxu0 %v77
    %507 = vmatprep.subr.mxu0 0.0
    %508 = vmatpush1.msra.mxu0 %v76
    %509 = vmatprep.subr.mxu0 0.0
    %510 = vmatpush1.msra.mxu0 %v75
    %511 = vmatprep.subr.mxu0 0.0
    %512 = vmatpush1.msra.mxu0 %v74
    %513 = vmatprep.subr.mxu0 0.0
    %514 = vmatpush1.msra.mxu0 %v73
    %515 = vmatprep.subr.mxu0 0.0
    %516 = vmatpush1.msra.mxu0 %v72
    %517 = vmatprep.subr.mxu0 0.0
    %518 = vmatpush1.msra.mxu0 %v71
    %519 = vmatprep.subr.mxu0 0.0
    %520 = vmatpush1.msra.mxu0 %v70
    %521 = vmatprep.subr.mxu0 0.0
    %522 = vmatpush2.msra.mxu0 0.0
    %523 = vmatprep.subr.mxu0 0.0
    %524 = vmatpush2.msra.mxu0 0.0
    %525 = vmatprep.subr.mxu0 0.0
    %526 = vmatpush2.msra.mxu0 0.0
    %527 = vmatprep.subr.mxu0 0.0
    %528 = vmatpush2.msra.mxu0 0.0
    %529 = vmatprep.subr.mxu0 0.0
    %530 = vmatpush2.msra.mxu0 0.0
    %531 = vmatprep.subr.mxu0 0.0
    %532 = vmatpush2.msra.mxu0 0.0
    %533 = vmatprep.subr.mxu0 0.0
    %534 = vmatpush2.msra.mxu0 0.0
    %535 = vmatprep.subr.mxu0 0.0
    %536 = vmatpush2.msra.mxu0 0.0
    %537 = vmatprep.subr.mxu0 0.0
    %538 = vmatpush2.msra.mxu0 0.0
    %539 = vmatprep.subr.mxu0 0.0
    %540 = vmatpush2.msra.mxu0 0.0
    %541 = vmatprep.subr.mxu0 0.0
    %542 = vmatpush2.msra.mxu0 0.0
    %543 = vmatprep.subr.mxu0 0.0
    %544 = vmatpush2.msra.mxu0 0.0
    %545 = vmatprep.subr.mxu0 0.0
    %546 = vmatpush2.msra.mxu0 0.0
    %547 = vmatprep.subr.mxu0 0.0
    %548 = vmatpush2.msra.mxu0 0.0
    %549 = vmatprep.subr.mxu0 0.0
    %550 = vmatpush2.msra.mxu0 0.0
    %551 = vmatprep.subr.mxu0 0.0
    %552 = vmatpush2.msra.mxu0 0.0
    %553 = vmatprep.mubr.f32.mxu0 0.0
    %554 = vmatmul.mubr.f32.gmra.mxu0 %v487
    %v555 = vpop.f32.mrf.mxu0
    %v556 = vadd.f32 %v83, %v555
    %v557 = vpop.f32.mrf.mxu0
    %558 = vdwg.mxu0
    %v559 = vtanh.pop %v556
    %v560 = vmul.f32 %v559, %v101
    %v561 = vadd.f32 %v560, %v108
    %v562 = vmul.f32 %v561, %v296
    %564 = vrot.lane.b32.xlu0 %v561, 64
    %v565 = vpop.permute.xlu0 %564
    %v567 = vmul.f32 %v561, %v565
    %569 = vrot.lane.b32.xlu0 %v567, 32
    %v570 = vpop.permute.xlu0 %569
    %v572 = vadd.f32 %v562, %v570
    %v573 = vtanh.pop %v572
    %575 = vrot.lane.b32.xlu0 %v573, 64
    %v576 = vpop.permute.xlu0 %575
    %v578 = vmul.f32 %v561, %v576
    %580 = vrot.lane.b32.xlu0 %v578, 32
    %v581 = vpop.permute.xlu0 %580
    %v582 = vsel %vm208, %v581, 0
    %584 = vmatprep.subr.mxu0 0.0
    %585 = vmatpush1.msra.mxu0 0.0
    %586 = vmatprep.subr.mxu0 0.0
    %587 = vmatpush1.msra.mxu0 0.0
    %588 = vmatprep.subr.mxu0 0.0
    %589 = vmatpush1.msra.mxu0 0.0
    %590 = vmatprep.subr.mxu0 0.0
    %591 = vmatpush1.msra.mxu0 0.0
    %592 = vmatprep.subr.mxu0 0.0
    %593 = vmatpush1.msra.mxu0 0.0
    %594 = vmatprep.subr.mxu0 0.0
    %595 = vmatpush1.msra.mxu0 0.0
    %596 = vmatprep.subr.mxu0 0.0
    %597 = vmatpush1.msra.mxu0 0.0
    %598 = vmatprep.subr.mxu0 0.0
    %599 = vmatpush1.msra.mxu0 0.0
    %600 = vmatprep.subr.mxu0 0.0
    %601 = vmatpush1.msra.mxu0 0.0
    %602 = vmatprep.subr.mxu0 0.0
    %603 = vmatpush1.msra.mxu0 0.0
    %604 = vmatprep.subr.mxu0 0.0
    %605 = vmatpush1.msra.mxu0 0.0
    %606 = vmatprep.subr.mxu0 0.0
    %607 = vmatpush1.msra.mxu0 0.0
    %608 = vmatprep.subr.mxu0 0.0
    %609 = vmatpush1.msra.mxu0 %v88
    %610 = vmatprep.subr.mxu0 0.0
    %611 = vmatpush1.msra.mxu0 %v87
    %612 = vmatprep.subr.mxu0 0.0
    %613 = vmatpush1.msra.mxu0 %v86
    %614 = vmatprep.subr.mxu0 0.0
    %615 = vmatpush1.msra.mxu0 %v85
    %616 = vmatprep.subr.mxu0 0.0
    %617 = vmatpush2.msra.mxu0 0.0
    %618 = vmatprep.subr.mxu0 0.0
    %619 = vmatpush2.msra.mxu0 0.0
    %620 = vmatprep.subr.mxu0 0.0
    %621 = vmatpush2.msra.mxu0 0.0
    %622 = vmatprep.subr.mxu0 0.0
    %623 = vmatpush2.msra.mxu0 0.0
    %624 = vmatprep.subr.mxu0 0.0
    %625 = vmatpush2.msra.mxu0 0.0
    %626 = vmatprep.subr.mxu0 0.0
    %627 = vmatpush2.msra.mxu0 0.0
    %628 = vmatprep.subr.mxu0 0.0
    %629 = vmatpush2.msra.mxu0 0.0
    %630 = vmatprep.subr.mxu0 0.0
    %631 = vmatpush2.msra.mxu0 0.0
    %632 = vmatprep.subr.mxu0 0.0
    %633 = vmatpush2.msra.mxu0 0.0
    %634 = vmatprep.subr.mxu0 0.0
    %635 = vmatpush2.msra.mxu0 0.0
    %636 = vmatprep.subr.mxu0 0.0
    %637 = vmatpush2.msra.mxu0 0.0
    %638 = vmatprep.subr.mxu0 0.0
    %639 = vmatpush2.msra.mxu0 0.0
    %640 = vmatprep.subr.mxu0 0.0
    %641 = vmatpush2.msra.mxu0 0.0
    %642 = vmatprep.subr.mxu0 0.0
    %643 = vmatpush2.msra.mxu0 0.0
    %644 = vmatprep.subr.mxu0 0.0
    %645 = vmatpush2.msra.mxu0 0.0
    %646 = vmatprep.subr.mxu0 0.0
    %647 = vmatpush2.msra.mxu0 0.0
    %648 = vmatprep.mubr.f32.mxu0 0.0
    %649 = vmatmul.mubr.f32.gmra.mxu0 %v582
    %v650 = vpop.f32.mrf.mxu0
    %v651 = vadd.f32 %v94, %v650
    %v652 = vpop.f32.mrf.mxu0
    %653 = vdwg.mxu0
    %s654 = scalar_lea.vmem %s9, 8
    %655 = vst.msk [vmem:[%s654] sm:$0xff] %vm378, %v651
    %657 = vrot.lane.b32.xlu0 %v477, 64
    %v658 = vpop.permute.xlu0 %657
    %v660 = vsel %vm208, %v581, %v658
    %v662 = vsel %vm110, %v660, 0
    %664 = vmatprep.subr.mxu0 0.0
    %665 = vmatpush1.msra.mxu0 0.0
    %666 = vmatprep.subr.mxu0 0.0
    %667 = vmatpush1.msra.mxu0 0.0
    %668 = vmatprep.subr.mxu0 0.0
    %669 = vmatpush1.msra.mxu0 0.0
    %670 = vmatprep.subr.mxu0 0.0
    %671 = vmatpush1.msra.mxu0 0.0
    %672 = vmatprep.subr.mxu0 0.0
    %673 = vmatpush1.msra.mxu0 0.0
    %674 = vmatprep.subr.mxu0 0.0
    %675 = vmatpush1.msra.mxu0 0.0
    %676 = vmatprep.subr.mxu0 0.0
    %677 = vmatpush1.msra.mxu0 0.0
    %678 = vmatprep.subr.mxu0 0.0
    %679 = vmatpush1.msra.mxu0 0.0
    %680 = vmatprep.subr.mxu0 0.0
    %681 = vmatpush1.msra.mxu0 %v69
    %682 = vmatprep.subr.mxu0 0.0
    %683 = vmatpush1.msra.mxu0 %v68
    %684 = vmatprep.subr.mxu0 0.0
    %685 = vmatpush1.msra.mxu0 %v67
    %686 = vmatprep.subr.mxu0 0.0
    %687 = vmatpush1.msra.mxu0 %v66
    %688 = vmatprep.subr.mxu0 0.0
    %689 = vmatpush1.msra.mxu0 %v65
    %690 = vmatprep.subr.mxu0 0.0
    %691 = vmatpush1.msra.mxu0 %v64
    %692 = vmatprep.subr.mxu0 0.0
    %693 = vmatpush1.msra.mxu0 %v63
    %694 = vmatprep.subr.mxu0 0.0
    %695 = vmatpush1.msra.mxu0 %v62
    %696 = vmatprep.subr.mxu0 0.0
    %697 = vmatpush2.msra.mxu0 0.0
    %698 = vmatprep.subr.mxu0 0.0
    %699 = vmatpush2.msra.mxu0 0.0
    %700 = vmatprep.subr.mxu0 0.0
    %701 = vmatpush2.msra.mxu0 0.0
    %702 = vmatprep.subr.mxu0 0.0
    %703 = vmatpush2.msra.mxu0 0.0
    %704 = vmatprep.subr.mxu0 0.0
    %705 = vmatpush2.msra.mxu0 0.0
    %706 = vmatprep.subr.mxu0 0.0
    %707 = vmatpush2.msra.mxu0 0.0
    %708 = vmatprep.subr.mxu0 0.0
    %709 = vmatpush2.msra.mxu0 0.0
    %710 = vmatprep.subr.mxu0 0.0
    %711 = vmatpush2.msra.mxu0 0.0
    %712 = vmatprep.subr.mxu0 0.0
    %713 = vmatpush2.msra.mxu0 0.0
    %714 = vmatprep.subr.mxu0 0.0
    %715 = vmatpush2.msra.mxu0 0.0
    %716 = vmatprep.subr.mxu0 0.0
    %717 = vmatpush2.msra.mxu0 0.0
    %718 = vmatprep.subr.mxu0 0.0
    %719 = vmatpush2.msra.mxu0 0.0
    %720 = vmatprep.subr.mxu0 0.0
    %721 = vmatpush2.msra.mxu0 0.0
    %722 = vmatprep.subr.mxu0 0.0
    %723 = vmatpush2.msra.mxu0 0.0
    %724 = vmatprep.subr.mxu0 0.0
    %725 = vmatpush2.msra.mxu0 0.0
    %726 = vmatprep.subr.mxu0 0.0
    %727 = vmatpush2.msra.mxu0 0.0
    %728 = vmatprep.mubr.f32.mxu0 0.0
    %729 = vmatmul.mubr.f32.gmra.mxu0 %v662
    %v730 = vpop.f32.mrf.mxu0
    %v731 = vadd.f32 %v61, %v730
    %v732 = vpop.f32.mrf.mxu0
    %733 = vdwg.mxu0
    %v734 = vtanh.pop %v731
    %v735 = vmul.f32 %v734, %v101
    %v736 = vadd.f32 %v735, %v108
    %v737 = vmul.f32 %v736, %v471
    %739 = vrot.lane.b32.xlu0 %v736, 64
    %v740 = vpop.permute.xlu0 %739
    %v742 = vmul.f32 %v736, %v740
    %744 = vrot.lane.b32.xlu0 %v742, 32
    %v745 = vpop.permute.xlu0 %744
    %v747 = vadd.f32 %v737, %v745
    %v748 = vtanh.pop %v747
    %750 = vrot.lane.b32.xlu0 %v748, 64
    %v751 = vpop.permute.xlu0 %750
    %v753 = vmul.f32 %v736, %v751
    %755 = vrot.lane.b32.xlu0 %v753, 32
    %v756 = vpop.permute.xlu0 %755
    %758 = vrot.lane.b32.xlu0 %v578, 64
    %v759 = vpop.permute.xlu0 %758
    %v761 = vsel %vm208, %v756, %v759
    %v763 = vsel %vm110, %v761, 0
    %765 = vmatprep.subr.mxu0 0.0
    %766 = vmatpush1.msra.mxu0 0.0
    %767 = vmatprep.subr.mxu0 0.0
    %768 = vmatpush1.msra.mxu0 0.0
    %769 = vmatprep.subr.mxu0 0.0
    %770 = vmatpush1.msra.mxu0 0.0
    %771 = vmatprep.subr.mxu0 0.0
    %772 = vmatpush1.msra.mxu0 0.0
    %773 = vmatprep.subr.mxu0 0.0
    %774 = vmatpush1.msra.mxu0 0.0
    %775 = vmatprep.subr.mxu0 0.0
    %776 = vmatpush1.msra.mxu0 0.0
    %777 = vmatprep.subr.mxu0 0.0
    %778 = vmatpush1.msra.mxu0 0.0
    %779 = vmatprep.subr.mxu0 0.0
    %780 = vmatpush1.msra.mxu0 0.0
    %781 = vmatprep.subr.mxu0 0.0
    %782 = vmatpush1.msra.mxu0 %v77
    %783 = vmatprep.subr.mxu0 0.0
    %784 = vmatpush1.msra.mxu0 %v76
    %785 = vmatprep.subr.mxu0 0.0
    %786 = vmatpush1.msra.mxu0 %v75
    %787 = vmatprep.subr.mxu0 0.0
    %788 = vmatpush1.msra.mxu0 %v74
    %789 = vmatprep.subr.mxu0 0.0
    %790 = vmatpush1.msra.mxu0 %v73
    %791 = vmatprep.subr.mxu0 0.0
    %792 = vmatpush1.msra.mxu0 %v72
    %793 = vmatprep.subr.mxu0 0.0
    %794 = vmatpush1.msra.mxu0 %v71
    %795 = vmatprep.subr.mxu0 0.0
    %796 = vmatpush1.msra.mxu0 %v70
    %797 = vmatprep.subr.mxu0 0.0
    %798 = vmatpush2.msra.mxu0 0.0
    %799 = vmatprep.subr.mxu0 0.0
    %800 = vmatpush2.msra.mxu0 0.0
    %801 = vmatprep.subr.mxu0 0.0
    %802 = vmatpush2.msra.mxu0 0.0
    %803 = vmatprep.subr.mxu0 0.0
    %804 = vmatpush2.msra.mxu0 0.0
    %805 = vmatprep.subr.mxu0 0.0
    %806 = vmatpush2.msra.mxu0 0.0
    %807 = vmatprep.subr.mxu0 0.0
    %808 = vmatpush2.msra.mxu0 0.0
    %809 = vmatprep.subr.mxu0 0.0
    %810 = vmatpush2.msra.mxu0 0.0
    %811 = vmatprep.subr.mxu0 0.0
    %812 = vmatpush2.msra.mxu0 0.0
    %813 = vmatprep.subr.mxu0 0.0
    %814 = vmatpush2.msra.mxu0 0.0
    %815 = vmatprep.subr.mxu0 0.0
    %816 = vmatpush2.msra.mxu0 0.0
    %817 = vmatprep.subr.mxu0 0.0
    %818 = vmatpush2.msra.mxu0 0.0
    %819 = vmatprep.subr.mxu0 0.0
    %820 = vmatpush2.msra.mxu0 0.0
    %821 = vmatprep.subr.mxu0 0.0
    %822 = vmatpush2.msra.mxu0 0.0
    %823 = vmatprep.subr.mxu0 0.0
    %824 = vmatpush2.msra.mxu0 0.0
    %825 = vmatprep.subr.mxu0 0.0
    %826 = vmatpush2.msra.mxu0 0.0
    %827 = vmatprep.subr.mxu0 0.0
    %828 = vmatpush2.msra.mxu0 0.0
    %829 = vmatprep.mubr.f32.mxu0 0.0
    %830 = vmatmul.mubr.f32.gmra.mxu0 %v763
    %v831 = vpop.f32.mrf.mxu0
    %v832 = vadd.f32 %v83, %v831
    %v833 = vpop.f32.mrf.mxu0
    %834 = vdwg.mxu0
    %v835 = vtanh.pop %v832
    %v836 = vmul.f32 %v835, %v101
    %v837 = vadd.f32 %v836, %v108
    %v838 = vmul.f32 %v837, %v572
    %840 = vrot.lane.b32.xlu0 %v837, 64
    %v841 = vpop.permute.xlu0 %840
    %v843 = vmul.f32 %v837, %v841
    %845 = vrot.lane.b32.xlu0 %v843, 32
    %v846 = vpop.permute.xlu0 %845
    %v848 = vadd.f32 %v838, %v846
    %v849 = vtanh.pop %v848
    %851 = vrot.lane.b32.xlu0 %v849, 64
    %v852 = vpop.permute.xlu0 %851
    %v854 = vmul.f32 %v837, %v852
    %856 = vrot.lane.b32.xlu0 %v854, 32
    %v857 = vpop.permute.xlu0 %856
    %v858 = vsel %vm208, %v857, 0
    %860 = vmatprep.subr.mxu0 0.0
    %861 = vmatpush1.msra.mxu0 0.0
    %862 = vmatprep.subr.mxu0 0.0
    %863 = vmatpush1.msra.mxu0 0.0
    %864 = vmatprep.subr.mxu0 0.0
    %865 = vmatpush1.msra.mxu0 0.0
    %866 = vmatprep.subr.mxu0 0.0
    %867 = vmatpush1.msra.mxu0 0.0
    %868 = vmatprep.subr.mxu0 0.0
    %869 = vmatpush1.msra.mxu0 0.0
    %870 = vmatprep.subr.mxu0 0.0
    %871 = vmatpush1.msra.mxu0 0.0
    %872 = vmatprep.subr.mxu0 0.0
    %873 = vmatpush1.msra.mxu0 0.0
    %874 = vmatprep.subr.mxu0 0.0
    %875 = vmatpush1.msra.mxu0 0.0
    %876 = vmatprep.subr.mxu0 0.0
    %877 = vmatpush1.msra.mxu0 0.0
    %878 = vmatprep.subr.mxu0 0.0
    %879 = vmatpush1.msra.mxu0 0.0
    %880 = vmatprep.subr.mxu0 0.0
    %881 = vmatpush1.msra.mxu0 0.0
    %882 = vmatprep.subr.mxu0 0.0
    %883 = vmatpush1.msra.mxu0 0.0
    %884 = vmatprep.subr.mxu0 0.0
    %885 = vmatpush1.msra.mxu0 %v88
    %886 = vmatprep.subr.mxu0 0.0
    %887 = vmatpush1.msra.mxu0 %v87
    %888 = vmatprep.subr.mxu0 0.0
    %889 = vmatpush1.msra.mxu0 %v86
    %890 = vmatprep.subr.mxu0 0.0
    %891 = vmatpush1.msra.mxu0 %v85
    %892 = vmatprep.subr.mxu0 0.0
    %893 = vmatpush2.msra.mxu0 0.0
    %894 = vmatprep.subr.mxu0 0.0
    %895 = vmatpush2.msra.mxu0 0.0
    %896 = vmatprep.subr.mxu0 0.0
    %897 = vmatpush2.msra.mxu0 0.0
    %898 = vmatprep.subr.mxu0 0.0
    %899 = vmatpush2.msra.mxu0 0.0
    %900 = vmatprep.subr.mxu0 0.0
    %901 = vmatpush2.msra.mxu0 0.0
    %902 = vmatprep.subr.mxu0 0.0
    %903 = vmatpush2.msra.mxu0 0.0
    %904 = vmatprep.subr.mxu0 0.0
    %905 = vmatpush2.msra.mxu0 0.0
    %906 = vmatprep.subr.mxu0 0.0
    %907 = vmatpush2.msra.mxu0 0.0
    %908 = vmatprep.subr.mxu0 0.0
    %909 = vmatpush2.msra.mxu0 0.0
    %910 = vmatprep.subr.mxu0 0.0
    %911 = vmatpush2.msra.mxu0 0.0
    %912 = vmatprep.subr.mxu0 0.0
    %913 = vmatpush2.msra.mxu0 0.0
    %914 = vmatprep.subr.mxu0 0.0
    %915 = vmatpush2.msra.mxu0 0.0
    %916 = vmatprep.subr.mxu0 0.0
    %917 = vmatpush2.msra.mxu0 0.0
    %918 = vmatprep.subr.mxu0 0.0
    %919 = vmatpush2.msra.mxu0 0.0
    %920 = vmatprep.subr.mxu0 0.0
    %921 = vmatpush2.msra.mxu0 0.0
    %922 = vmatprep.subr.mxu0 0.0
    %923 = vmatpush2.msra.mxu0 0.0
    %924 = vmatprep.mubr.f32.mxu0 0.0
    %925 = vmatmul.mubr.f32.gmra.mxu0 %v858
    %v926 = vpop.f32.mrf.mxu0
    %v927 = vadd.f32 %v94, %v926
    %v928 = vpop.f32.mrf.mxu0
    %929 = vdwg.mxu0
    %s930 = scalar_lea.vmem %s9, 16
    %931 = vst.msk [vmem:[%s930] sm:$0xff] %vm378, %v927
    %933 = vrot.lane.b32.xlu0 %v753, 64
    %v934 = vpop.permute.xlu0 %933
    %v936 = vsel %vm208, %v857, %v934
    %v938 = vsel %vm110, %v936, 0
    %940 = vmatprep.subr.mxu0 0.0
    %941 = vmatpush1.msra.mxu0 0.0
    %942 = vmatprep.subr.mxu0 0.0
    %943 = vmatpush1.msra.mxu0 0.0
    %944 = vmatprep.subr.mxu0 0.0
    %945 = vmatpush1.msra.mxu0 0.0
    %946 = vmatprep.subr.mxu0 0.0
    %947 = vmatpush1.msra.mxu0 0.0
    %948 = vmatprep.subr.mxu0 0.0
    %949 = vmatpush1.msra.mxu0 0.0
    %950 = vmatprep.subr.mxu0 0.0
    %951 = vmatpush1.msra.mxu0 0.0
    %952 = vmatprep.subr.mxu0 0.0
    %953 = vmatpush1.msra.mxu0 0.0
    %954 = vmatprep.subr.mxu0 0.0
    %955 = vmatpush1.msra.mxu0 0.0
    %956 = vmatprep.subr.mxu0 0.0
    %957 = vmatpush1.msra.mxu0 %v69
    %958 = vmatprep.subr.mxu0 0.0
    %959 = vmatpush1.msra.mxu0 %v68
    %960 = vmatprep.subr.mxu0 0.0
    %961 = vmatpush1.msra.mxu0 %v67
    %962 = vmatprep.subr.mxu0 0.0
    %963 = vmatpush1.msra.mxu0 %v66
    %964 = vmatprep.subr.mxu0 0.0
    %965 = vmatpush1.msra.mxu0 %v65
    %966 = vmatprep.subr.mxu0 0.0
    %967 = vmatpush1.msra.mxu0 %v64
    %968 = vmatprep.subr.mxu0 0.0
    %969 = vmatpush1.msra.mxu0 %v63
    %970 = vmatprep.subr.mxu0 0.0
    %971 = vmatpush1.msra.mxu0 %v62
    %972 = vmatprep.subr.mxu0 0.0
    %973 = vmatpush2.msra.mxu0 0.0
    %974 = vmatprep.subr.mxu0 0.0
    %975 = vmatpush2.msra.mxu0 0.0
    %976 = vmatprep.subr.mxu0 0.0
    %977 = vmatpush2.msra.mxu0 0.0
    %978 = vmatprep.subr.mxu0 0.0
    %979 = vmatpush2.msra.mxu0 0.0
    %980 = vmatprep.subr.mxu0 0.0
    %981 = vmatpush2.msra.mxu0 0.0
    %982 = vmatprep.subr.mxu0 0.0
    %983 = vmatpush2.msra.mxu0 0.0
    %984 = vmatprep.subr.mxu0 0.0
    %985 = vmatpush2.msra.mxu0 0.0
    %986 = vmatprep.subr.mxu0 0.0
    %987 = vmatpush2.msra.mxu0 0.0
    %988 = vmatprep.subr.mxu0 0.0
    %989 = vmatpush2.msra.mxu0 0.0
    %990 = vmatprep.subr.mxu0 0.0
    %991 = vmatpush2.msra.mxu0 0.0
    %992 = vmatprep.subr.mxu0 0.0
    %993 = vmatpush2.msra.mxu0 0.0
    %994 = vmatprep.subr.mxu0 0.0
    %995 = vmatpush2.msra.mxu0 0.0
    %996 = vmatprep.subr.mxu0 0.0
    %997 = vmatpush2.msra.mxu0 0.0
    %998 = vmatprep.subr.mxu0 0.0
    %999 = vmatpush2.msra.mxu0 0.0
    %1000 = vmatprep.subr.mxu0 0.0
    %1001 = vmatpush2.msra.mxu0 0.0
    %1002 = vmatprep.subr.mxu0 0.0
    %1003 = vmatpush2.msra.mxu0 0.0
    %1004 = vmatprep.mubr.f32.mxu0 0.0
    %1005 = vmatmul.mubr.f32.gmra.mxu0 %v938
    %v1006 = vpop.f32.mrf.mxu0
    %v1007 = vadd.f32 %v61, %v1006
    %v1008 = vpop.f32.mrf.mxu0
    %1009 = vdwg.mxu0
    %v1010 = vtanh.pop %v1007
    %v1011 = vmul.f32 %v1010, %v101
    %v1012 = vadd.f32 %v1011, %v108
    %v1013 = vmul.f32 %v1012, %v747
    %1015 = vrot.lane.b32.xlu0 %v1012, 64
    %v1016 = vpop.permute.xlu0 %1015
    %v1018 = vmul.f32 %v1012, %v1016
    %1020 = vrot.lane.b32.xlu0 %v1018, 32
    %v1021 = vpop.permute.xlu0 %1020
    %v1023 = vadd.f32 %v1013, %v1021
    %v1024 = vtanh.pop %v1023
    %1026 = vrot.lane.b32.xlu0 %v1024, 64
    %v1027 = vpop.permute.xlu0 %1026
    %v1029 = vmul.f32 %v1012, %v1027
    %1031 = vrot.lane.b32.xlu0 %v1029, 32
    %v1032 = vpop.permute.xlu0 %1031
    %1034 = vrot.lane.b32.xlu0 %v854, 64
    %v1035 = vpop.permute.xlu0 %1034
    %v1037 = vsel %vm208, %v1032, %v1035
    %v1039 = vsel %vm110, %v1037, 0
    %1041 = vmatprep.subr.mxu0 0.0
    %1042 = vmatpush1.msra.mxu0 0.0
    %1043 = vmatprep.subr.mxu0 0.0
    %1044 = vmatpush1.msra.mxu0 0.0
    %1045 = vmatprep.subr.mxu0 0.0
    %1046 = vmatpush1.msra.mxu0 0.0
    %1047 = vmatprep.subr.mxu0 0.0
    %1048 = vmatpush1.msra.mxu0 0.0
    %1049 = vmatprep.subr.mxu0 0.0
    %1050 = vmatpush1.msra.mxu0 0.0
    %1051 = vmatprep.subr.mxu0 0.0
    %1052 = vmatpush1.msra.mxu0 0.0
    %1053 = vmatprep.subr.mxu0 0.0
    %1054 = vmatpush1.msra.mxu0 0.0
    %1055 = vmatprep.subr.mxu0 0.0
    %1056 = vmatpush1.msra.mxu0 0.0
    %1057 = vmatprep.subr.mxu0 0.0
    %1058 = vmatpush1.msra.mxu0 %v77
    %1059 = vmatprep.subr.mxu0 0.0
    %1060 = vmatpush1.msra.mxu0 %v76
    %1061 = vmatprep.subr.mxu0 0.0
    %1062 = vmatpush1.msra.mxu0 %v75
    %1063 = vmatprep.subr.mxu0 0.0
    %1064 = vmatpush1.msra.mxu0 %v74
    %1065 = vmatprep.subr.mxu0 0.0
    %1066 = vmatpush1.msra.mxu0 %v73
    %1067 = vmatprep.subr.mxu0 0.0
    %1068 = vmatpush1.msra.mxu0 %v72
    %1069 = vmatprep.subr.mxu0 0.0
    %1070 = vmatpush1.msra.mxu0 %v71
    %1071 = vmatprep.subr.mxu0 0.0
    %1072 = vmatpush1.msra.mxu0 %v70
    %1073 = vmatprep.subr.mxu0 0.0
    %1074 = vmatpush2.msra.mxu0 0.0
    %1075 = vmatprep.subr.mxu0 0.0
    %1076 = vmatpush2.msra.mxu0 0.0
    %1077 = vmatprep.subr.mxu0 0.0
    %1078 = vmatpush2.msra.mxu0 0.0
    %1079 = vmatprep.subr.mxu0 0.0
    %1080 = vmatpush2.msra.mxu0 0.0
    %1081 = vmatprep.subr.mxu0 0.0
    %1082 = vmatpush2.msra.mxu0 0.0
    %1083 = vmatprep.subr.mxu0 0.0
    %1084 = vmatpush2.msra.mxu0 0.0
    %1085 = vmatprep.subr.mxu0 0.0
    %1086 = vmatpush2.msra.mxu0 0.0
    %1087 = vmatprep.subr.mxu0 0.0
    %1088 = vmatpush2.msra.mxu0 0.0
    %1089 = vmatprep.subr.mxu0 0.0
    %1090 = vmatpush2.msra.mxu0 0.0
    %1091 = vmatprep.subr.mxu0 0.0
    %1092 = vmatpush2.msra.mxu0 0.0
    %1093 = vmatprep.subr.mxu0 0.0
    %1094 = vmatpush2.msra.mxu0 0.0
    %1095 = vmatprep.subr.mxu0 0.0
    %1096 = vmatpush2.msra.mxu0 0.0
    %1097 = vmatprep.subr.mxu0 0.0
    %1098 = vmatpush2.msra.mxu0 0.0
    %1099 = vmatprep.subr.mxu0 0.0
    %1100 = vmatpush2.msra.mxu0 0.0
    %1101 = vmatprep.subr.mxu0 0.0
    %1102 = vmatpush2.msra.mxu0 0.0
    %1103 = vmatprep.subr.mxu0 0.0
    %1104 = vmatpush2.msra.mxu0 0.0
    %1105 = vmatprep.mubr.f32.mxu0 0.0
    %1106 = vmatmul.mubr.f32.gmra.mxu0 %v1039
    %v1107 = vpop.f32.mrf.mxu0
    %v1108 = vadd.f32 %v83, %v1107
    %v1109 = vpop.f32.mrf.mxu0
    %1110 = vdwg.mxu0
    %v1111 = vtanh.pop %v1108
    %v1112 = vmul.f32 %v1111, %v101
    %v1113 = vadd.f32 %v1112, %v108
    %v1114 = vmul.f32 %v1113, %v848
    %1116 = vrot.lane.b32.xlu0 %v1113, 64
    %v1117 = vpop.permute.xlu0 %1116
    %v1119 = vmul.f32 %v1113, %v1117
    %1121 = vrot.lane.b32.xlu0 %v1119, 32
    %v1122 = vpop.permute.xlu0 %1121
    %v1124 = vadd.f32 %v1114, %v1122
    %v1125 = vtanh.pop %v1124
    %1127 = vrot.lane.b32.xlu0 %v1125, 64
    %v1128 = vpop.permute.xlu0 %1127
    %v1130 = vmul.f32 %v1113, %v1128
    %1132 = vrot.lane.b32.xlu0 %v1130, 32
    %v1133 = vpop.permute.xlu0 %1132
    %v1134 = vsel %vm208, %v1133, 0
    %1136 = vmatprep.subr.mxu0 0.0
    %1137 = vmatpush1.msra.mxu0 0.0
    %1138 = vmatprep.subr.mxu0 0.0
    %1139 = vmatpush1.msra.mxu0 0.0
    %1140 = vmatprep.subr.mxu0 0.0
    %1141 = vmatpush1.msra.mxu0 0.0
    %1142 = vmatprep.subr.mxu0 0.0
    %1143 = vmatpush1.msra.mxu0 0.0
    %1144 = vmatprep.subr.mxu0 0.0
    %1145 = vmatpush1.msra.mxu0 0.0
    %1146 = vmatprep.subr.mxu0 0.0
    %1147 = vmatpush1.msra.mxu0 0.0
    %1148 = vmatprep.subr.mxu0 0.0
    %1149 = vmatpush1.msra.mxu0 0.0
    %1150 = vmatprep.subr.mxu0 0.0
    %1151 = vmatpush1.msra.mxu0 0.0
    %1152 = vmatprep.subr.mxu0 0.0
    %1153 = vmatpush1.msra.mxu0 0.0
    %1154 = vmatprep.subr.mxu0 0.0
    %1155 = vmatpush1.msra.mxu0 0.0
    %1156 = vmatprep.subr.mxu0 0.0
    %1157 = vmatpush1.msra.mxu0 0.0
    %1158 = vmatprep.subr.mxu0 0.0
    %1159 = vmatpush1.msra.mxu0 0.0
    %1160 = vmatprep.subr.mxu0 0.0
    %1161 = vmatpush1.msra.mxu0 %v88
    %1162 = vmatprep.subr.mxu0 0.0
    %1163 = vmatpush1.msra.mxu0 %v87
    %1164 = vmatprep.subr.mxu0 0.0
    %1165 = vmatpush1.msra.mxu0 %v86
    %1166 = vmatprep.subr.mxu0 0.0
    %1167 = vmatpush1.msra.mxu0 %v85
    %1168 = vmatprep.subr.mxu0 0.0
    %1169 = vmatpush2.msra.mxu0 0.0
    %1170 = vmatprep.subr.mxu0 0.0
    %1171 = vmatpush2.msra.mxu0 0.0
    %1172 = vmatprep.subr.mxu0 0.0
    %1173 = vmatpush2.msra.mxu0 0.0
    %1174 = vmatprep.subr.mxu0 0.0
    %1175 = vmatpush2.msra.mxu0 0.0
    %1176 = vmatprep.subr.mxu0 0.0
    %1177 = vmatpush2.msra.mxu0 0.0
    %1178 = vmatprep.subr.mxu0 0.0
    %1179 = vmatpush2.msra.mxu0 0.0
    %1180 = vmatprep.subr.mxu0 0.0
    %1181 = vmatpush2.msra.mxu0 0.0
    %1182 = vmatprep.subr.mxu0 0.0
    %1183 = vmatpush2.msra.mxu0 0.0
    %1184 = vmatprep.subr.mxu0 0.0
    %1185 = vmatpush2.msra.mxu0 0.0
    %1186 = vmatprep.subr.mxu0 0.0
    %1187 = vmatpush2.msra.mxu0 0.0
    %1188 = vmatprep.subr.mxu0 0.0
    %1189 = vmatpush2.msra.mxu0 0.0
    %1190 = vmatprep.subr.mxu0 0.0
    %1191 = vmatpush2.msra.mxu0 0.0
    %1192 = vmatprep.subr.mxu0 0.0
    %1193 = vmatpush2.msra.mxu0 0.0
    %1194 = vmatprep.subr.mxu0 0.0
    %1195 = vmatpush2.msra.mxu0 0.0
    %1196 = vmatprep.subr.mxu0 0.0
    %1197 = vmatpush2.msra.mxu0 0.0
    %1198 = vmatprep.subr.mxu0 0.0
    %1199 = vmatpush2.msra.mxu0 0.0
    %1200 = vmatprep.mubr.f32.mxu0 0.0
    %1201 = vmatmul.mubr.f32.gmra.mxu0 %v1134
    %v1202 = vpop.f32.mrf.mxu0
    %v1203 = vadd.f32 %v94, %v1202
    %v1204 = vpop.f32.mrf.mxu0
    %1205 = vdwg.mxu0
    %s1206 = scalar_lea.vmem %s9, 24
    %1207 = vst.msk [vmem:[%s1206] sm:$0xff] %vm378, %v1203
    %1209 = vrot.lane.b32.xlu0 %v1029, 64
    %v1210 = vpop.permute.xlu0 %1209
    %v1212 = vsel %vm208, %v1133, %v1210
    %v1214 = vsel %vm110, %v1212, 0
    %1216 = vmatprep.subr.mxu0 0.0
    %1217 = vmatpush1.msra.mxu0 0.0
    %1218 = vmatprep.subr.mxu0 0.0
    %1219 = vmatpush1.msra.mxu0 0.0
    %1220 = vmatprep.subr.mxu0 0.0
    %1221 = vmatpush1.msra.mxu0 0.0
    %1222 = vmatprep.subr.mxu0 0.0
    %1223 = vmatpush1.msra.mxu0 0.0
    %1224 = vmatprep.subr.mxu0 0.0
    %1225 = vmatpush1.msra.mxu0 0.0
    %1226 = vmatprep.subr.mxu0 0.0
    %1227 = vmatpush1.msra.mxu0 0.0
    %1228 = vmatprep.subr.mxu0 0.0
    %1229 = vmatpush1.msra.mxu0 0.0
    %1230 = vmatprep.subr.mxu0 0.0
    %1231 = vmatpush1.msra.mxu0 0.0
    %1232 = vmatprep.subr.mxu0 0.0
    %1233 = vmatpush1.msra.mxu0 %v69
    %1234 = vmatprep.subr.mxu0 0.0
    %1235 = vmatpush1.msra.mxu0 %v68
    %1236 = vmatprep.subr.mxu0 0.0
    %1237 = vmatpush1.msra.mxu0 %v67
    %1238 = vmatprep.subr.mxu0 0.0
    %1239 = vmatpush1.msra.mxu0 %v66
    %1240 = vmatprep.subr.mxu0 0.0
    %1241 = vmatpush1.msra.mxu0 %v65
    %1242 = vmatprep.subr.mxu0 0.0
    %1243 = vmatpush1.msra.mxu0 %v64
    %1244 = vmatprep.subr.mxu0 0.0
    %1245 = vmatpush1.msra.mxu0 %v63
    %1246 = vmatprep.subr.mxu0 0.0
    %1247 = vmatpush1.msra.mxu0 %v62
    %1248 = vmatprep.subr.mxu0 0.0
    %1249 = vmatpush2.msra.mxu0 0.0
    %1250 = vmatprep.subr.mxu0 0.0
    %1251 = vmatpush2.msra.mxu0 0.0
    %1252 = vmatprep.subr.mxu0 0.0
    %1253 = vmatpush2.msra.mxu0 0.0
    %1254 = vmatprep.subr.mxu0 0.0
    %1255 = vmatpush2.msra.mxu0 0.0
    %1256 = vmatprep.subr.mxu0 0.0
    %1257 = vmatpush2.msra.mxu0 0.0
    %1258 = vmatprep.subr.mxu0 0.0
    %1259 = vmatpush2.msra.mxu0 0.0
    %1260 = vmatprep.subr.mxu0 0.0
    %1261 = vmatpush2.msra.mxu0 0.0
    %1262 = vmatprep.subr.mxu0 0.0
    %1263 = vmatpush2.msra.mxu0 0.0
    %1264 = vmatprep.subr.mxu0 0.0
    %1265 = vmatpush2.msra.mxu0 0.0
    %1266 = vmatprep.subr.mxu0 0.0
    %1267 = vmatpush2.msra.mxu0 0.0
    %1268 = vmatprep.subr.mxu0 0.0
    %1269 = vmatpush2.msra.mxu0 0.0
    %1270 = vmatprep.subr.mxu0 0.0
    %1271 = vmatpush2.msra.mxu0 0.0
    %1272 = vmatprep.subr.mxu0 0.0
    %1273 = vmatpush2.msra.mxu0 0.0
    %1274 = vmatprep.subr.mxu0 0.0
    %1275 = vmatpush2.msra.mxu0 0.0
    %1276 = vmatprep.subr.mxu0 0.0
    %1277 = vmatpush2.msra.mxu0 0.0
    %1278 = vmatprep.subr.mxu0 0.0
    %1279 = vmatpush2.msra.mxu0 0.0
    %1280 = vmatprep.mubr.f32.mxu0 0.0
    %1281 = vmatmul.mubr.f32.gmra.mxu0 %v1214
    %v1282 = vpop.f32.mrf.mxu0
    %v1283 = vadd.f32 %v61, %v1282
    %v1284 = vpop.f32.mrf.mxu0
    %1285 = vdwg.mxu0
    %v1286 = vtanh.pop %v1283
    %v1287 = vmul.f32 %v1286, %v101
    %v1288 = vadd.f32 %v1287, %v108
    %v1289 = vmul.f32 %v1288, %v1023
    %1291 = vrot.lane.b32.xlu0 %v1288, 64
    %v1292 = vpop.permute.xlu0 %1291
    %v1294 = vmul.f32 %v1288, %v1292
    %1296 = vrot.lane.b32.xlu0 %v1294, 32
    %v1297 = vpop.permute.xlu0 %1296
    %v1299 = vadd.f32 %v1289, %v1297
    %v1300 = vtanh.pop %v1299
    %1302 = vrot.lane.b32.xlu0 %v1300, 64
    %v1303 = vpop.permute.xlu0 %1302
    %v1305 = vmul.f32 %v1288, %v1303
    %1307 = vrot.lane.b32.xlu0 %v1305, 32
    %v1308 = vpop.permute.xlu0 %1307
    %1310 = vrot.lane.b32.xlu0 %v1130, 64
    %v1311 = vpop.permute.xlu0 %1310
    %v1313 = vsel %vm208, %v1308, %v1311
    %v1315 = vsel %vm110, %v1313, 0
    %1317 = vmatprep.subr.mxu0 0.0
    %1318 = vmatpush1.msra.mxu0 0.0
    %1319 = vmatprep.subr.mxu0 0.0
    %1320 = vmatpush1.msra.mxu0 0.0
    %1321 = vmatprep.subr.mxu0 0.0
    %1322 = vmatpush1.msra.mxu0 0.0
    %1323 = vmatprep.subr.mxu0 0.0
    %1324 = vmatpush1.msra.mxu0 0.0
    %1325 = vmatprep.subr.mxu0 0.0
    %1326 = vmatpush1.msra.mxu0 0.0
    %1327 = vmatprep.subr.mxu0 0.0
    %1328 = vmatpush1.msra.mxu0 0.0
    %1329 = vmatprep.subr.mxu0 0.0
    %1330 = vmatpush1.msra.mxu0 0.0
    %1331 = vmatprep.subr.mxu0 0.0
    %1332 = vmatpush1.msra.mxu0 0.0
    %1333 = vmatprep.subr.mxu0 0.0
    %1334 = vmatpush1.msra.mxu0 %v77
    %1335 = vmatprep.subr.mxu0 0.0
    %1336 = vmatpush1.msra.mxu0 %v76
    %1337 = vmatprep.subr.mxu0 0.0
    %1338 = vmatpush1.msra.mxu0 %v75
    %1339 = vmatprep.subr.mxu0 0.0
    %1340 = vmatpush1.msra.mxu0 %v74
    %1341 = vmatprep.subr.mxu0 0.0
    %1342 = vmatpush1.msra.mxu0 %v73
    %1343 = vmatprep.subr.mxu0 0.0
    %1344 = vmatpush1.msra.mxu0 %v72
    %1345 = vmatprep.subr.mxu0 0.0
    %1346 = vmatpush1.msra.mxu0 %v71
    %1347 = vmatprep.subr.mxu0 0.0
    %1348 = vmatpush1.msra.mxu0 %v70
    %1349 = vmatprep.subr.mxu0 0.0
    %1350 = vmatpush2.msra.mxu0 0.0
    %1351 = vmatprep.subr.mxu0 0.0
    %1352 = vmatpush2.msra.mxu0 0.0
    %1353 = vmatprep.subr.mxu0 0.0
    %1354 = vmatpush2.msra.mxu0 0.0
    %1355 = vmatprep.subr.mxu0 0.0
    %1356 = vmatpush2.msra.mxu0 0.0
    %1357 = vmatprep.subr.mxu0 0.0
    %1358 = vmatpush2.msra.mxu0 0.0
    %1359 = vmatprep.subr.mxu0 0.0
    %1360 = vmatpush2.msra.mxu0 0.0
    %1361 = vmatprep.subr.mxu0 0.0
    %1362 = vmatpush2.msra.mxu0 0.0
    %1363 = vmatprep.subr.mxu0 0.0
    %1364 = vmatpush2.msra.mxu0 0.0
    %1365 = vmatprep.subr.mxu0 0.0
    %1366 = vmatpush2.msra.mxu0 0.0
    %1367 = vmatprep.subr.mxu0 0.0
    %1368 = vmatpush2.msra.mxu0 0.0
    %1369 = vmatprep.subr.mxu0 0.0
    %1370 = vmatpush2.msra.mxu0 0.0
    %1371 = vmatprep.subr.mxu0 0.0
    %1372 = vmatpush2.msra.mxu0 0.0
    %1373 = vmatprep.subr.mxu0 0.0
    %1374 = vmatpush2.msra.mxu0 0.0
    %1375 = vmatprep.subr.mxu0 0.0
    %1376 = vmatpush2.msra.mxu0 0.0
    %1377 = vmatprep.subr.mxu0 0.0
    %1378 = vmatpush2.msra.mxu0 0.0
    %1379 = vmatprep.subr.mxu0 0.0
    %1380 = vmatpush2.msra.mxu0 0.0
    %1381 = vmatprep.mubr.f32.mxu0 0.0
    %1382 = vmatmul.mubr.f32.gmra.mxu0 %v1315
    %v1383 = vpop.f32.mrf.mxu0
    %v1384 = vadd.f32 %v83, %v1383
    %v1385 = vpop.f32.mrf.mxu0
    %1386 = vdwg.mxu0
    %v1387 = vtanh.pop %v1384
    %v1388 = vmul.f32 %v1387, %v101
    %v1389 = vadd.f32 %v1388, %v108
    %v1390 = vmul.f32 %v1389, %v1124
    %1392 = vrot.lane.b32.xlu0 %v1389, 64
    %v1393 = vpop.permute.xlu0 %1392
    %v1395 = vmul.f32 %v1389, %v1393
    %1397 = vrot.lane.b32.xlu0 %v1395, 32
    %v1398 = vpop.permute.xlu0 %1397
    %v1400 = vadd.f32 %v1390, %v1398
    %v1401 = vtanh.pop %v1400
    %1403 = vrot.lane.b32.xlu0 %v1401, 64
    %v1404 = vpop.permute.xlu0 %1403
    %v1406 = vmul.f32 %v1389, %v1404
    %1408 = vrot.lane.b32.xlu0 %v1406, 32
    %v1409 = vpop.permute.xlu0 %1408
    %v1410 = vsel %vm208, %v1409, 0
    %1412 = vmatprep.subr.mxu0 0.0
    %1413 = vmatpush1.msra.mxu0 0.0
    %1414 = vmatprep.subr.mxu0 0.0
    %1415 = vmatpush1.msra.mxu0 0.0
    %1416 = vmatprep.subr.mxu0 0.0
    %1417 = vmatpush1.msra.mxu0 0.0
    %1418 = vmatprep.subr.mxu0 0.0
    %1419 = vmatpush1.msra.mxu0 0.0
    %1420 = vmatprep.subr.mxu0 0.0
    %1421 = vmatpush1.msra.mxu0 0.0
    %1422 = vmatprep.subr.mxu0 0.0
    %1423 = vmatpush1.msra.mxu0 0.0
    %1424 = vmatprep.subr.mxu0 0.0
    %1425 = vmatpush1.msra.mxu0 0.0
    %1426 = vmatprep.subr.mxu0 0.0
    %1427 = vmatpush1.msra.mxu0 0.0
    %1428 = vmatprep.subr.mxu0 0.0
    %1429 = vmatpush1.msra.mxu0 0.0
    %1430 = vmatprep.subr.mxu0 0.0
    %1431 = vmatpush1.msra.mxu0 0.0
    %1432 = vmatprep.subr.mxu0 0.0
    %1433 = vmatpush1.msra.mxu0 0.0
    %1434 = vmatprep.subr.mxu0 0.0
    %1435 = vmatpush1.msra.mxu0 0.0
    %1436 = vmatprep.subr.mxu0 0.0
    %1437 = vmatpush1.msra.mxu0 %v88
    %1438 = vmatprep.subr.mxu0 0.0
    %1439 = vmatpush1.msra.mxu0 %v87
    %1440 = vmatprep.subr.mxu0 0.0
    %1441 = vmatpush1.msra.mxu0 %v86
    %1442 = vmatprep.subr.mxu0 0.0
    %1443 = vmatpush1.msra.mxu0 %v85
    %1444 = vmatprep.subr.mxu0 0.0
    %1445 = vmatpush2.msra.mxu0 0.0
    %1446 = vmatprep.subr.mxu0 0.0
    %1447 = vmatpush2.msra.mxu0 0.0
    %1448 = vmatprep.subr.mxu0 0.0
    %1449 = vmatpush2.msra.mxu0 0.0
    %1450 = vmatprep.subr.mxu0 0.0
    %1451 = vmatpush2.msra.mxu0 0.0
    %1452 = vmatprep.subr.mxu0 0.0
    %1453 = vmatpush2.msra.mxu0 0.0
    %1454 = vmatprep.subr.mxu0 0.0
    %1455 = vmatpush2.msra.mxu0 0.0
    %1456 = vmatprep.subr.mxu0 0.0
    %1457 = vmatpush2.msra.mxu0 0.0
    %1458 = vmatprep.subr.mxu0 0.0
    %1459 = vmatpush2.msra.mxu0 0.0
    %1460 = vmatprep.subr.mxu0 0.0
    %1461 = vmatpush2.msra.mxu0 0.0
    %1462 = vmatprep.subr.mxu0 0.0
    %1463 = vmatpush2.msra.mxu0 0.0
    %1464 = vmatprep.subr.mxu0 0.0
    %1465 = vmatpush2.msra.mxu0 0.0
    %1466 = vmatprep.subr.mxu0 0.0
    %1467 = vmatpush2.msra.mxu0 0.0
    %1468 = vmatprep.subr.mxu0 0.0
    %1469 = vmatpush2.msra.mxu0 0.0
    %1470 = vmatprep.subr.mxu0 0.0
    %1471 = vmatpush2.msra.mxu0 0.0
    %1472 = vmatprep.subr.mxu0 0.0
    %1473 = vmatpush2.msra.mxu0 0.0
    %1474 = vmatprep.subr.mxu0 0.0
    %1475 = vmatpush2.msra.mxu0 0.0
    %1476 = vmatprep.mubr.f32.mxu0 0.0
    %1477 = vmatmul.mubr.f32.gmra.mxu0 %v1410
    %v1478 = vpop.f32.mrf.mxu0
    %v1479 = vadd.f32 %v94, %v1478
    %v1480 = vpop.f32.mrf.mxu0
    %1481 = vdwg.mxu0
    %s1482 = scalar_lea.vmem %s9, 32
    %1483 = vst.msk [vmem:[%s1482] sm:$0xff] %vm378, %v1479
    %1485 = vrot.lane.b32.xlu0 %v1305, 64
    %v1486 = vpop.permute.xlu0 %1485
    %v1488 = vsel %vm208, %v1409, %v1486
    %v1490 = vsel %vm110, %v1488, 0
    %1492 = vmatprep.subr.mxu0 0.0
    %1493 = vmatpush1.msra.mxu0 0.0
    %1494 = vmatprep.subr.mxu0 0.0
    %1495 = vmatpush1.msra.mxu0 0.0
    %1496 = vmatprep.subr.mxu0 0.0
    %1497 = vmatpush1.msra.mxu0 0.0
    %1498 = vmatprep.subr.mxu0 0.0
    %1499 = vmatpush1.msra.mxu0 0.0
    %1500 = vmatprep.subr.mxu0 0.0
    %1501 = vmatpush1.msra.mxu0 0.0
    %1502 = vmatprep.subr.mxu0 0.0
    %1503 = vmatpush1.msra.mxu0 0.0
    %1504 = vmatprep.subr.mxu0 0.0
    %1505 = vmatpush1.msra.mxu0 0.0
    %1506 = vmatprep.subr.mxu0 0.0
    %1507 = vmatpush1.msra.mxu0 0.0
    %1508 = vmatprep.subr.mxu0 0.0
    %1509 = vmatpush1.msra.mxu0 %v69
    %1510 = vmatprep.subr.mxu0 0.0
    %1511 = vmatpush1.msra.mxu0 %v68
    %1512 = vmatprep.subr.mxu0 0.0
    %1513 = vmatpush1.msra.mxu0 %v67
    %1514 = vmatprep.subr.mxu0 0.0
    %1515 = vmatpush1.msra.mxu0 %v66
    %1516 = vmatprep.subr.mxu0 0.0
    %1517 = vmatpush1.msra.mxu0 %v65
    %1518 = vmatprep.subr.mxu0 0.0
    %1519 = vmatpush1.msra.mxu0 %v64
    %1520 = vmatprep.subr.mxu0 0.0
    %1521 = vmatpush1.msra.mxu0 %v63
    %1522 = vmatprep.subr.mxu0 0.0
    %1523 = vmatpush1.msra.mxu0 %v62
    %1524 = vmatprep.subr.mxu0 0.0
    %1525 = vmatpush2.msra.mxu0 0.0
    %1526 = vmatprep.subr.mxu0 0.0
    %1527 = vmatpush2.msra.mxu0 0.0
    %1528 = vmatprep.subr.mxu0 0.0
    %1529 = vmatpush2.msra.mxu0 0.0
    %1530 = vmatprep.subr.mxu0 0.0
    %1531 = vmatpush2.msra.mxu0 0.0
    %1532 = vmatprep.subr.mxu0 0.0
    %1533 = vmatpush2.msra.mxu0 0.0
    %1534 = vmatprep.subr.mxu0 0.0
    %1535 = vmatpush2.msra.mxu0 0.0
    %1536 = vmatprep.subr.mxu0 0.0
    %1537 = vmatpush2.msra.mxu0 0.0
    %1538 = vmatprep.subr.mxu0 0.0
    %1539 = vmatpush2.msra.mxu0 0.0
    %1540 = vmatprep.subr.mxu0 0.0
    %1541 = vmatpush2.msra.mxu0 0.0
    %1542 = vmatprep.subr.mxu0 0.0
    %1543 = vmatpush2.msra.mxu0 0.0
    %1544 = vmatprep.subr.mxu0 0.0
    %1545 = vmatpush2.msra.mxu0 0.0
    %1546 = vmatprep.subr.mxu0 0.0
    %1547 = vmatpush2.msra.mxu0 0.0
    %1548 = vmatprep.subr.mxu0 0.0
    %1549 = vmatpush2.msra.mxu0 0.0
    %1550 = vmatprep.subr.mxu0 0.0
    %1551 = vmatpush2.msra.mxu0 0.0
    %1552 = vmatprep.subr.mxu0 0.0
    %1553 = vmatpush2.msra.mxu0 0.0
    %1554 = vmatprep.subr.mxu0 0.0
    %1555 = vmatpush2.msra.mxu0 0.0
    %1556 = vmatprep.mubr.f32.mxu0 0.0
    %1557 = vmatmul.mubr.f32.gmra.mxu0 %v1490
    %v1558 = vpop.f32.mrf.mxu0
    %v1559 = vadd.f32 %v61, %v1558
    %v1560 = vpop.f32.mrf.mxu0
    %1561 = vdwg.mxu0
    %v1562 = vtanh.pop %v1559
    %v1563 = vmul.f32 %v1562, %v101
    %v1564 = vadd.f32 %v1563, %v108
    %v1565 = vmul.f32 %v1564, %v1299
    %1567 = vrot.lane.b32.xlu0 %v1564, 64
    %v1568 = vpop.permute.xlu0 %1567
    %v1570 = vmul.f32 %v1564, %v1568
    %1572 = vrot.lane.b32.xlu0 %v1570, 32
    %v1573 = vpop.permute.xlu0 %1572
    %v1575 = vadd.f32 %v1565, %v1573
    %v1576 = vtanh.pop %v1575
    %1578 = vrot.lane.b32.xlu0 %v1576, 64
    %v1579 = vpop.permute.xlu0 %1578
    %v1581 = vmul.f32 %v1564, %v1579
    %1583 = vrot.lane.b32.xlu0 %v1581, 32
    %v1584 = vpop.permute.xlu0 %1583
    %1586 = vrot.lane.b32.xlu0 %v1406, 64
    %v1587 = vpop.permute.xlu0 %1586
    %v1589 = vsel %vm208, %v1584, %v1587
    %v1591 = vsel %vm110, %v1589, 0
    %1593 = vmatprep.subr.mxu0 0.0
    %1594 = vmatpush1.msra.mxu0 0.0
    %1595 = vmatprep.subr.mxu0 0.0
    %1596 = vmatpush1.msra.mxu0 0.0
    %1597 = vmatprep.subr.mxu0 0.0
    %1598 = vmatpush1.msra.mxu0 0.0
    %1599 = vmatprep.subr.mxu0 0.0
    %1600 = vmatpush1.msra.mxu0 0.0
    %1601 = vmatprep.subr.mxu0 0.0
    %1602 = vmatpush1.msra.mxu0 0.0
    %1603 = vmatprep.subr.mxu0 0.0
    %1604 = vmatpush1.msra.mxu0 0.0
    %1605 = vmatprep.subr.mxu0 0.0
    %1606 = vmatpush1.msra.mxu0 0.0
    %1607 = vmatprep.subr.mxu0 0.0
    %1608 = vmatpush1.msra.mxu0 0.0
    %1609 = vmatprep.subr.mxu0 0.0
    %1610 = vmatpush1.msra.mxu0 %v77
    %1611 = vmatprep.subr.mxu0 0.0
    %1612 = vmatpush1.msra.mxu0 %v76
    %1613 = vmatprep.subr.mxu0 0.0
    %1614 = vmatpush1.msra.mxu0 %v75
    %1615 = vmatprep.subr.mxu0 0.0
    %1616 = vmatpush1.msra.mxu0 %v74
    %1617 = vmatprep.subr.mxu0 0.0
    %1618 = vmatpush1.msra.mxu0 %v73
    %1619 = vmatprep.subr.mxu0 0.0
    %1620 = vmatpush1.msra.mxu0 %v72
    %1621 = vmatprep.subr.mxu0 0.0
    %1622 = vmatpush1.msra.mxu0 %v71
    %1623 = vmatprep.subr.mxu0 0.0
    %1624 = vmatpush1.msra.mxu0 %v70
    %1625 = vmatprep.subr.mxu0 0.0
    %1626 = vmatpush2.msra.mxu0 0.0
    %1627 = vmatprep.subr.mxu0 0.0
    %1628 = vmatpush2.msra.mxu0 0.0
    %1629 = vmatprep.subr.mxu0 0.0
    %1630 = vmatpush2.msra.mxu0 0.0
    %1631 = vmatprep.subr.mxu0 0.0
    %1632 = vmatpush2.msra.mxu0 0.0
    %1633 = vmatprep.subr.mxu0 0.0
    %1634 = vmatpush2.msra.mxu0 0.0
    %1635 = vmatprep.subr.mxu0 0.0
    %1636 = vmatpush2.msra.mxu0 0.0
    %1637 = vmatprep.subr.mxu0 0.0
    %1638 = vmatpush2.msra.mxu0 0.0
    %1639 = vmatprep.subr.mxu0 0.0
    %1640 = vmatpush2.msra.mxu0 0.0
    %1641 = vmatprep.subr.mxu0 0.0
    %1642 = vmatpush2.msra.mxu0 0.0
    %1643 = vmatprep.subr.mxu0 0.0
    %1644 = vmatpush2.msra.mxu0 0.0
    %1645 = vmatprep.subr.mxu0 0.0
    %1646 = vmatpush2.msra.mxu0 0.0
    %1647 = vmatprep.subr.mxu0 0.0
    %1648 = vmatpush2.msra.mxu0 0.0
    %1649 = vmatprep.subr.mxu0 0.0
    %1650 = vmatpush2.msra.mxu0 0.0
    %1651 = vmatprep.subr.mxu0 0.0
    %1652 = vmatpush2.msra.mxu0 0.0
    %1653 = vmatprep.subr.mxu0 0.0
    %1654 = vmatpush2.msra.mxu0 0.0
    %1655 = vmatprep.subr.mxu0 0.0
    %1656 = vmatpush2.msra.mxu0 0.0
    %1657 = vmatprep.mubr.f32.mxu0 0.0
    %1658 = vmatmul.mubr.f32.gmra.mxu0 %v1591
    %v1659 = vpop.f32.mrf.mxu0
    %v1660 = vadd.f32 %v83, %v1659
    %v1661 = vpop.f32.mrf.mxu0
    %1662 = vdwg.mxu0
    %v1663 = vtanh.pop %v1660
    %v1664 = vmul.f32 %v1663, %v101
    %v1665 = vadd.f32 %v1664, %v108
    %v1666 = vmul.f32 %v1665, %v1400
    %1668 = vrot.lane.b32.xlu0 %v1665, 64
    %v1669 = vpop.permute.xlu0 %1668
    %v1671 = vmul.f32 %v1665, %v1669
    %1673 = vrot.lane.b32.xlu0 %v1671, 32
    %v1674 = vpop.permute.xlu0 %1673
    %v1676 = vadd.f32 %v1666, %v1674
    %v1677 = vtanh.pop %v1676
    %1679 = vrot.lane.b32.xlu0 %v1677, 64
    %v1680 = vpop.permute.xlu0 %1679
    %v1682 = vmul.f32 %v1665, %v1680
    %1684 = vrot.lane.b32.xlu0 %v1682, 32
    %v1685 = vpop.permute.xlu0 %1684
    %v1686 = vsel %vm208, %v1685, 0
    %1688 = vmatprep.subr.mxu0 0.0
    %1689 = vmatpush1.msra.mxu0 0.0
    %1690 = vmatprep.subr.mxu0 0.0
    %1691 = vmatpush1.msra.mxu0 0.0
    %1692 = vmatprep.subr.mxu0 0.0
    %1693 = vmatpush1.msra.mxu0 0.0
    %1694 = vmatprep.subr.mxu0 0.0
    %1695 = vmatpush1.msra.mxu0 0.0
    %1696 = vmatprep.subr.mxu0 0.0
    %1697 = vmatpush1.msra.mxu0 0.0
    %1698 = vmatprep.subr.mxu0 0.0
    %1699 = vmatpush1.msra.mxu0 0.0
    %1700 = vmatprep.subr.mxu0 0.0
    %1701 = vmatpush1.msra.mxu0 0.0
    %1702 = vmatprep.subr.mxu0 0.0
    %1703 = vmatpush1.msra.mxu0 0.0
    %1704 = vmatprep.subr.mxu0 0.0
    %1705 = vmatpush1.msra.mxu0 0.0
    %1706 = vmatprep.subr.mxu0 0.0
    %1707 = vmatpush1.msra.mxu0 0.0
    %1708 = vmatprep.subr.mxu0 0.0
    %1709 = vmatpush1.msra.mxu0 0.0
    %1710 = vmatprep.subr.mxu0 0.0
    %1711 = vmatpush1.msra.mxu0 0.0
    %1712 = vmatprep.subr.mxu0 0.0
    %1713 = vmatpush1.msra.mxu0 %v88
    %1714 = vmatprep.subr.mxu0 0.0
    %1715 = vmatpush1.msra.mxu0 %v87
    %1716 = vmatprep.subr.mxu0 0.0
    %1717 = vmatpush1.msra.mxu0 %v86
    %1718 = vmatprep.subr.mxu0 0.0
    %1719 = vmatpush1.msra.mxu0 %v85
    %1720 = vmatprep.subr.mxu0 0.0
    %1721 = vmatpush2.msra.mxu0 0.0
    %1722 = vmatprep.subr.mxu0 0.0
    %1723 = vmatpush2.msra.mxu0 0.0
    %1724 = vmatprep.subr.mxu0 0.0
    %1725 = vmatpush2.msra.mxu0 0.0
    %1726 = vmatprep.subr.mxu0 0.0
    %1727 = vmatpush2.msra.mxu0 0.0
    %1728 = vmatprep.subr.mxu0 0.0
    %1729 = vmatpush2.msra.mxu0 0.0
    %1730 = vmatprep.subr.mxu0 0.0
    %1731 = vmatpush2.msra.mxu0 0.0
    %1732 = vmatprep.subr.mxu0 0.0
    %1733 = vmatpush2.msra.mxu0 0.0
    %1734 = vmatprep.subr.mxu0 0.0
    %1735 = vmatpush2.msra.mxu0 0.0
    %1736 = vmatprep.subr.mxu0 0.0
    %1737 = vmatpush2.msra.mxu0 0.0
    %1738 = vmatprep.subr.mxu0 0.0
    %1739 = vmatpush2.msra.mxu0 0.0
    %1740 = vmatprep.subr.mxu0 0.0
    %1741 = vmatpush2.msra.mxu0 0.0
    %1742 = vmatprep.subr.mxu0 0.0
    %1743 = vmatpush2.msra.mxu0 0.0
    %1744 = vmatprep.subr.mxu0 0.0
    %1745 = vmatpush2.msra.mxu0 0.0
    %1746 = vmatprep.subr.mxu0 0.0
    %1747 = vmatpush2.msra.mxu0 0.0
    %1748 = vmatprep.subr.mxu0 0.0
    %1749 = vmatpush2.msra.mxu0 0.0
    %1750 = vmatprep.subr.mxu0 0.0
    %1751 = vmatpush2.msra.mxu0 0.0
    %1752 = vmatprep.mubr.f32.mxu0 0.0
    %1753 = vmatmul.mubr.f32.gmra.mxu0 %v1686
    %v1754 = vpop.f32.mrf.mxu0
    %v1755 = vadd.f32 %v94, %v1754
    %v1756 = vpop.f32.mrf.mxu0
    %1757 = vdwg.mxu0
    %s1758 = scalar_lea.vmem %s9, 40
    %1759 = vst.msk [vmem:[%s1758] sm:$0xff] %vm378, %v1755
    %1761 = vrot.lane.b32.xlu0 %v1581, 64
    %v1762 = vpop.permute.xlu0 %1761
    %v1764 = vsel %vm208, %v1685, %v1762
    %v1766 = vsel %vm110, %v1764, 0
    %1768 = vmatprep.subr.mxu0 0.0
    %1769 = vmatpush1.msra.mxu0 0.0
    %1770 = vmatprep.subr.mxu0 0.0
    %1771 = vmatpush1.msra.mxu0 0.0
    %1772 = vmatprep.subr.mxu0 0.0
    %1773 = vmatpush1.msra.mxu0 0.0
    %1774 = vmatprep.subr.mxu0 0.0
    %1775 = vmatpush1.msra.mxu0 0.0
    %1776 = vmatprep.subr.mxu0 0.0
    %1777 = vmatpush1.msra.mxu0 0.0
    %1778 = vmatprep.subr.mxu0 0.0
    %1779 = vmatpush1.msra.mxu0 0.0
    %1780 = vmatprep.subr.mxu0 0.0
    %1781 = vmatpush1.msra.mxu0 0.0
    %1782 = vmatprep.subr.mxu0 0.0
    %1783 = vmatpush1.msra.mxu0 0.0
    %1784 = vmatprep.subr.mxu0 0.0
    %1785 = vmatpush1.msra.mxu0 %v69
    %1786 = vmatprep.subr.mxu0 0.0
    %1787 = vmatpush1.msra.mxu0 %v68
    %1788 = vmatprep.subr.mxu0 0.0
    %1789 = vmatpush1.msra.mxu0 %v67
    %1790 = vmatprep.subr.mxu0 0.0
    %1791 = vmatpush1.msra.mxu0 %v66
    %1792 = vmatprep.subr.mxu0 0.0
    %1793 = vmatpush1.msra.mxu0 %v65
    %1794 = vmatprep.subr.mxu0 0.0
    %1795 = vmatpush1.msra.mxu0 %v64
    %1796 = vmatprep.subr.mxu0 0.0
    %1797 = vmatpush1.msra.mxu0 %v63
    %1798 = vmatprep.subr.mxu0 0.0
    %1799 = vmatpush1.msra.mxu0 %v62
    %1800 = vmatprep.subr.mxu0 0.0
    %1801 = vmatpush2.msra.mxu0 0.0
    %1802 = vmatprep.subr.mxu0 0.0
    %1803 = vmatpush2.msra.mxu0 0.0
    %1804 = vmatprep.subr.mxu0 0.0
    %1805 = vmatpush2.msra.mxu0 0.0
    %1806 = vmatprep.subr.mxu0 0.0
    %1807 = vmatpush2.msra.mxu0 0.0
    %1808 = vmatprep.subr.mxu0 0.0
    %1809 = vmatpush2.msra.mxu0 0.0
    %1810 = vmatprep.subr.mxu0 0.0
    %1811 = vmatpush2.msra.mxu0 0.0
    %1812 = vmatprep.subr.mxu0 0.0
    %1813 = vmatpush2.msra.mxu0 0.0
    %1814 = vmatprep.subr.mxu0 0.0
    %1815 = vmatpush2.msra.mxu0 0.0
    %1816 = vmatprep.subr.mxu0 0.0
    %1817 = vmatpush2.msra.mxu0 0.0
    %1818 = vmatprep.subr.mxu0 0.0
    %1819 = vmatpush2.msra.mxu0 0.0
    %1820 = vmatprep.subr.mxu0 0.0
    %1821 = vmatpush2.msra.mxu0 0.0
    %1822 = vmatprep.subr.mxu0 0.0
    %1823 = vmatpush2.msra.mxu0 0.0
    %1824 = vmatprep.subr.mxu0 0.0
    %1825 = vmatpush2.msra.mxu0 0.0
    %1826 = vmatprep.subr.mxu0 0.0
    %1827 = vmatpush2.msra.mxu0 0.0
    %1828 = vmatprep.subr.mxu0 0.0
    %1829 = vmatpush2.msra.mxu0 0.0
    %1830 = vmatprep.subr.mxu0 0.0
    %1831 = vmatpush2.msra.mxu0 0.0
    %1832 = vmatprep.mubr.f32.mxu0 0.0
    %1833 = vmatmul.mubr.f32.gmra.mxu0 %v1766
    %v1834 = vpop.f32.mrf.mxu0
    %v1835 = vadd.f32 %v61, %v1834
    %v1836 = vpop.f32.mrf.mxu0
    %1837 = vdwg.mxu0
    %v1838 = vtanh.pop %v1835
    %v1839 = vmul.f32 %v1838, %v101
    %v1840 = vadd.f32 %v1839, %v108
    %v1841 = vmul.f32 %v1840, %v1575
    %1843 = vrot.lane.b32.xlu0 %v1840, 64
    %v1844 = vpop.permute.xlu0 %1843
    %v1846 = vmul.f32 %v1840, %v1844
    %1848 = vrot.lane.b32.xlu0 %v1846, 32
    %v1849 = vpop.permute.xlu0 %1848
    %v1851 = vadd.f32 %v1841, %v1849
    %v1852 = vtanh.pop %v1851
    %1854 = vrot.lane.b32.xlu0 %v1852, 64
    %v1855 = vpop.permute.xlu0 %1854
    %v1857 = vmul.f32 %v1840, %v1855
    %1859 = vrot.lane.b32.xlu0 %v1857, 32
    %v1860 = vpop.permute.xlu0 %1859
    %1862 = vrot.lane.b32.xlu0 %v1682, 64
    %v1863 = vpop.permute.xlu0 %1862
    %v1865 = vsel %vm208, %v1860, %v1863
    %v1867 = vsel %vm110, %v1865, 0
    %1869 = vmatprep.subr.mxu0 0.0
    %1870 = vmatpush1.msra.mxu0 0.0
    %1871 = vmatprep.subr.mxu0 0.0
    %1872 = vmatpush1.msra.mxu0 0.0
    %1873 = vmatprep.subr.mxu0 0.0
    %1874 = vmatpush1.msra.mxu0 0.0
    %1875 = vmatprep.subr.mxu0 0.0
    %1876 = vmatpush1.msra.mxu0 0.0
    %1877 = vmatprep.subr.mxu0 0.0
    %1878 = vmatpush1.msra.mxu0 0.0
    %1879 = vmatprep.subr.mxu0 0.0
    %1880 = vmatpush1.msra.mxu0 0.0
    %1881 = vmatprep.subr.mxu0 0.0
    %1882 = vmatpush1.msra.mxu0 0.0
    %1883 = vmatprep.subr.mxu0 0.0
    %1884 = vmatpush1.msra.mxu0 0.0
    %1885 = vmatprep.subr.mxu0 0.0
    %1886 = vmatpush1.msra.mxu0 %v77
    %1887 = vmatprep.subr.mxu0 0.0
    %1888 = vmatpush1.msra.mxu0 %v76
    %1889 = vmatprep.subr.mxu0 0.0
    %1890 = vmatpush1.msra.mxu0 %v75
    %1891 = vmatprep.subr.mxu0 0.0
    %1892 = vmatpush1.msra.mxu0 %v74
    %1893 = vmatprep.subr.mxu0 0.0
    %1894 = vmatpush1.msra.mxu0 %v73
    %1895 = vmatprep.subr.mxu0 0.0
    %1896 = vmatpush1.msra.mxu0 %v72
    %1897 = vmatprep.subr.mxu0 0.0
    %1898 = vmatpush1.msra.mxu0 %v71
    %1899 = vmatprep.subr.mxu0 0.0
    %1900 = vmatpush1.msra.mxu0 %v70
    %1901 = vmatprep.subr.mxu0 0.0
    %1902 = vmatpush2.msra.mxu0 0.0
    %1903 = vmatprep.subr.mxu0 0.0
    %1904 = vmatpush2.msra.mxu0 0.0
    %1905 = vmatprep.subr.mxu0 0.0
    %1906 = vmatpush2.msra.mxu0 0.0
    %1907 = vmatprep.subr.mxu0 0.0
    %1908 = vmatpush2.msra.mxu0 0.0
    %1909 = vmatprep.subr.mxu0 0.0
    %1910 = vmatpush2.msra.mxu0 0.0
    %1911 = vmatprep.subr.mxu0 0.0
    %1912 = vmatpush2.msra.mxu0 0.0
    %1913 = vmatprep.subr.mxu0 0.0
    %1914 = vmatpush2.msra.mxu0 0.0
    %1915 = vmatprep.subr.mxu0 0.0
    %1916 = vmatpush2.msra.mxu0 0.0
    %1917 = vmatprep.subr.mxu0 0.0
    %1918 = vmatpush2.msra.mxu0 0.0
    %1919 = vmatprep.subr.mxu0 0.0
    %1920 = vmatpush2.msra.mxu0 0.0
    %1921 = vmatprep.subr.mxu0 0.0
    %1922 = vmatpush2.msra.mxu0 0.0
    %1923 = vmatprep.subr.mxu0 0.0
    %1924 = vmatpush2.msra.mxu0 0.0
    %1925 = vmatprep.subr.mxu0 0.0
    %1926 = vmatpush2.msra.mxu0 0.0
    %1927 = vmatprep.subr.mxu0 0.0
    %1928 = vmatpush2.msra.mxu0 0.0
    %1929 = vmatprep.subr.mxu0 0.0
    %1930 = vmatpush2.msra.mxu0 0.0
    %1931 = vmatprep.subr.mxu0 0.0
    %1932 = vmatpush2.msra.mxu0 0.0
    %1933 = vmatprep.mubr.f32.mxu0 0.0
    %1934 = vmatmul.mubr.f32.gmra.mxu0 %v1867
    %v1935 = vpop.f32.mrf.mxu0
    %v1936 = vadd.f32 %v83, %v1935
    %v1937 = vpop.f32.mrf.mxu0
    %1938 = vdwg.mxu0
    %v1939 = vtanh.pop %v1936
    %v1940 = vmul.f32 %v1939, %v101
    %v1941 = vadd.f32 %v1940, %v108
    %v1942 = vmul.f32 %v1941, %v1676
    %1944 = vrot.lane.b32.xlu0 %v1941, 64
    %v1945 = vpop.permute.xlu0 %1944
    %v1947 = vmul.f32 %v1941, %v1945
    %1949 = vrot.lane.b32.xlu0 %v1947, 32
    %v1950 = vpop.permute.xlu0 %1949
    %v1952 = vadd.f32 %v1942, %v1950
    %v1953 = vtanh.pop %v1952
    %1955 = vrot.lane.b32.xlu0 %v1953, 64
    %v1956 = vpop.permute.xlu0 %1955
    %v1958 = vmul.f32 %v1941, %v1956
    %1960 = vrot.lane.b32.xlu0 %v1958, 32
    %v1961 = vpop.permute.xlu0 %1960
    %v1962 = vsel %vm208, %v1961, 0
    %1964 = vmatprep.subr.mxu0 0.0
    %1965 = vmatpush1.msra.mxu0 0.0
    %1966 = vmatprep.subr.mxu0 0.0
    %1967 = vmatpush1.msra.mxu0 0.0
    %1968 = vmatprep.subr.mxu0 0.0
    %1969 = vmatpush1.msra.mxu0 0.0
    %1970 = vmatprep.subr.mxu0 0.0
    %1971 = vmatpush1.msra.mxu0 0.0
    %1972 = vmatprep.subr.mxu0 0.0
    %1973 = vmatpush1.msra.mxu0 0.0
    %1974 = vmatprep.subr.mxu0 0.0
    %1975 = vmatpush1.msra.mxu0 0.0
    %1976 = vmatprep.subr.mxu0 0.0
    %1977 = vmatpush1.msra.mxu0 0.0
    %1978 = vmatprep.subr.mxu0 0.0
    %1979 = vmatpush1.msra.mxu0 0.0
    %1980 = vmatprep.subr.mxu0 0.0
    %1981 = vmatpush1.msra.mxu0 0.0
    %1982 = vmatprep.subr.mxu0 0.0
    %1983 = vmatpush1.msra.mxu0 0.0
    %1984 = vmatprep.subr.mxu0 0.0
    %1985 = vmatpush1.msra.mxu0 0.0
    %1986 = vmatprep.subr.mxu0 0.0
    %1987 = vmatpush1.msra.mxu0 0.0
    %1988 = vmatprep.subr.mxu0 0.0
    %1989 = vmatpush1.msra.mxu0 %v88
    %1990 = vmatprep.subr.mxu0 0.0
    %1991 = vmatpush1.msra.mxu0 %v87
    %1992 = vmatprep.subr.mxu0 0.0
    %1993 = vmatpush1.msra.mxu0 %v86
    %1994 = vmatprep.subr.mxu0 0.0
    %1995 = vmatpush1.msra.mxu0 %v85
    %1996 = vmatprep.subr.mxu0 0.0
    %1997 = vmatpush2.msra.mxu0 0.0
    %1998 = vmatprep.subr.mxu0 0.0
    %1999 = vmatpush2.msra.mxu0 0.0
    %2000 = vmatprep.subr.mxu0 0.0
    %2001 = vmatpush2.msra.mxu0 0.0
    %2002 = vmatprep.subr.mxu0 0.0
    %2003 = vmatpush2.msra.mxu0 0.0
    %2004 = vmatprep.subr.mxu0 0.0
    %2005 = vmatpush2.msra.mxu0 0.0
    %2006 = vmatprep.subr.mxu0 0.0
    %2007 = vmatpush2.msra.mxu0 0.0
    %2008 = vmatprep.subr.mxu0 0.0
    %2009 = vmatpush2.msra.mxu0 0.0
    %2010 = vmatprep.subr.mxu0 0.0
    %2011 = vmatpush2.msra.mxu0 0.0
    %2012 = vmatprep.subr.mxu0 0.0
    %2013 = vmatpush2.msra.mxu0 0.0
    %2014 = vmatprep.subr.mxu0 0.0
    %2015 = vmatpush2.msra.mxu0 0.0
    %2016 = vmatprep.subr.mxu0 0.0
    %2017 = vmatpush2.msra.mxu0 0.0
    %2018 = vmatprep.subr.mxu0 0.0
    %2019 = vmatpush2.msra.mxu0 0.0
    %2020 = vmatprep.subr.mxu0 0.0
    %2021 = vmatpush2.msra.mxu0 0.0
    %2022 = vmatprep.subr.mxu0 0.0
    %2023 = vmatpush2.msra.mxu0 0.0
    %2024 = vmatprep.subr.mxu0 0.0
    %2025 = vmatpush2.msra.mxu0 0.0
    %2026 = vmatprep.subr.mxu0 0.0
    %2027 = vmatpush2.msra.mxu0 0.0
    %2028 = vmatprep.mubr.f32.mxu0 0.0
    %2029 = vmatmul.mubr.f32.gmra.mxu0 %v1962
    %v2030 = vpop.f32.mrf.mxu0
    %v2031 = vadd.f32 %v94, %v2030
    %v2032 = vpop.f32.mrf.mxu0
    %2033 = vdwg.mxu0
    %s2034 = scalar_lea.vmem %s9, 48
    %2035 = vst.msk [vmem:[%s2034] sm:$0xff] %vm378, %v2031
    %2037 = vrot.lane.b32.xlu0 %v1857, 64
    %v2038 = vpop.permute.xlu0 %2037
    %v2040 = vsel %vm208, %v1961, %v2038
    %v2042 = vsel %vm110, %v2040, 0
    %2044 = vmatprep.subr.mxu0 0.0
    %2045 = vmatpush1.msra.mxu0 0.0
    %2046 = vmatprep.subr.mxu0 0.0
    %2047 = vmatpush1.msra.mxu0 0.0
    %2048 = vmatprep.subr.mxu0 0.0
    %2049 = vmatpush1.msra.mxu0 0.0
    %2050 = vmatprep.subr.mxu0 0.0
    %2051 = vmatpush1.msra.mxu0 0.0
    %2052 = vmatprep.subr.mxu0 0.0
    %2053 = vmatpush1.msra.mxu0 0.0
    %2054 = vmatprep.subr.mxu0 0.0
    %2055 = vmatpush1.msra.mxu0 0.0
    %2056 = vmatprep.subr.mxu0 0.0
    %2057 = vmatpush1.msra.mxu0 0.0
    %2058 = vmatprep.subr.mxu0 0.0
    %2059 = vmatpush1.msra.mxu0 0.0
    %2060 = vmatprep.subr.mxu0 0.0
    %2061 = vmatpush1.msra.mxu0 %v69
    %2062 = vmatprep.subr.mxu0 0.0
    %2063 = vmatpush1.msra.mxu0 %v68
    %2064 = vmatprep.subr.mxu0 0.0
    %2065 = vmatpush1.msra.mxu0 %v67
    %2066 = vmatprep.subr.mxu0 0.0
    %2067 = vmatpush1.msra.mxu0 %v66
    %2068 = vmatprep.subr.mxu0 0.0
    %2069 = vmatpush1.msra.mxu0 %v65
    %2070 = vmatprep.subr.mxu0 0.0
    %2071 = vmatpush1.msra.mxu0 %v64
    %2072 = vmatprep.subr.mxu0 0.0
    %2073 = vmatpush1.msra.mxu0 %v63
    %2074 = vmatprep.subr.mxu0 0.0
    %2075 = vmatpush1.msra.mxu0 %v62
    %2076 = vmatprep.subr.mxu0 0.0
    %2077 = vmatpush2.msra.mxu0 0.0
    %2078 = vmatprep.subr.mxu0 0.0
    %2079 = vmatpush2.msra.mxu0 0.0
    %2080 = vmatprep.subr.mxu0 0.0
    %2081 = vmatpush2.msra.mxu0 0.0
    %2082 = vmatprep.subr.mxu0 0.0
    %2083 = vmatpush2.msra.mxu0 0.0
    %2084 = vmatprep.subr.mxu0 0.0
    %2085 = vmatpush2.msra.mxu0 0.0
    %2086 = vmatprep.subr.mxu0 0.0
    %2087 = vmatpush2.msra.mxu0 0.0
    %2088 = vmatprep.subr.mxu0 0.0
    %2089 = vmatpush2.msra.mxu0 0.0
    %2090 = vmatprep.subr.mxu0 0.0
    %2091 = vmatpush2.msra.mxu0 0.0
    %2092 = vmatprep.subr.mxu0 0.0
    %2093 = vmatpush2.msra.mxu0 0.0
    %2094 = vmatprep.subr.mxu0 0.0
    %2095 = vmatpush2.msra.mxu0 0.0
    %2096 = vmatprep.subr.mxu0 0.0
    %2097 = vmatpush2.msra.mxu0 0.0
    %2098 = vmatprep.subr.mxu0 0.0
    %2099 = vmatpush2.msra.mxu0 0.0
    %2100 = vmatprep.subr.mxu0 0.0
    %2101 = vmatpush2.msra.mxu0 0.0
    %2102 = vmatprep.subr.mxu0 0.0
    %2103 = vmatpush2.msra.mxu0 0.0
    %2104 = vmatprep.subr.mxu0 0.0
    %2105 = vmatpush2.msra.mxu0 0.0
    %2106 = vmatprep.subr.mxu0 0.0
    %2107 = vmatpush2.msra.mxu0 0.0
    %2108 = vmatprep.mubr.f32.mxu0 0.0
    %2109 = vmatmul.mubr.f32.gmra.mxu0 %v2042
    %v2110 = vpop.f32.mrf.mxu0
    %v2111 = vadd.f32 %v61, %v2110
    %v2112 = vpop.f32.mrf.mxu0
    %2113 = vdwg.mxu0
    %v2114 = vtanh.pop %v2111
    %v2115 = vmul.f32 %v2114, %v101
    %v2116 = vadd.f32 %v2115, %v108
    %v2117 = vmul.f32 %v2116, %v1851
    %2119 = vrot.lane.b32.xlu0 %v2116, 64
    %v2120 = vpop.permute.xlu0 %2119
    %v2122 = vmul.f32 %v2116, %v2120
    %2124 = vrot.lane.b32.xlu0 %v2122, 32
    %v2125 = vpop.permute.xlu0 %2124
    %v2127 = vadd.f32 %v2117, %v2125
    %v2128 = vtanh.pop %v2127
    %2130 = vrot.lane.b32.xlu0 %v2128, 64
    %v2131 = vpop.permute.xlu0 %2130
    %v2133 = vmul.f32 %v2116, %v2131
    %2135 = vrot.lane.b32.xlu0 %v2133, 32
    %v2136 = vpop.permute.xlu0 %2135
    %2138 = vrot.lane.b32.xlu0 %v1958, 64
    %v2139 = vpop.permute.xlu0 %2138
    %v2141 = vsel %vm208, %v2136, %v2139
    %v2143 = vsel %vm110, %v2141, 0
    %2145 = vmatprep.subr.mxu0 0.0
    %2146 = vmatpush1.msra.mxu0 0.0
    %2147 = vmatprep.subr.mxu0 0.0
    %2148 = vmatpush1.msra.mxu0 0.0
    %2149 = vmatprep.subr.mxu0 0.0
    %2150 = vmatpush1.msra.mxu0 0.0
    %2151 = vmatprep.subr.mxu0 0.0
    %2152 = vmatpush1.msra.mxu0 0.0
    %2153 = vmatprep.subr.mxu0 0.0
    %2154 = vmatpush1.msra.mxu0 0.0
    %2155 = vmatprep.subr.mxu0 0.0
    %2156 = vmatpush1.msra.mxu0 0.0
    %2157 = vmatprep.subr.mxu0 0.0
    %2158 = vmatpush1.msra.mxu0 0.0
    %2159 = vmatprep.subr.mxu0 0.0
    %2160 = vmatpush1.msra.mxu0 0.0
    %2161 = vmatprep.subr.mxu0 0.0
    %2162 = vmatpush1.msra.mxu0 %v77
    %2163 = vmatprep.subr.mxu0 0.0
    %2164 = vmatpush1.msra.mxu0 %v76
    %2165 = vmatprep.subr.mxu0 0.0
    %2166 = vmatpush1.msra.mxu0 %v75
    %2167 = vmatprep.subr.mxu0 0.0
    %2168 = vmatpush1.msra.mxu0 %v74
    %2169 = vmatprep.subr.mxu0 0.0
    %2170 = vmatpush1.msra.mxu0 %v73
    %2171 = vmatprep.subr.mxu0 0.0
    %2172 = vmatpush1.msra.mxu0 %v72
    %2173 = vmatprep.subr.mxu0 0.0
    %2174 = vmatpush1.msra.mxu0 %v71
    %2175 = vmatprep.subr.mxu0 0.0
    %2176 = vmatpush1.msra.mxu0 %v70
    %2177 = vmatprep.subr.mxu0 0.0
    %2178 = vmatpush2.msra.mxu0 0.0
    %2179 = vmatprep.subr.mxu0 0.0
    %2180 = vmatpush2.msra.mxu0 0.0
    %2181 = vmatprep.subr.mxu0 0.0
    %2182 = vmatpush2.msra.mxu0 0.0
    %2183 = vmatprep.subr.mxu0 0.0
    %2184 = vmatpush2.msra.mxu0 0.0
    %2185 = vmatprep.subr.mxu0 0.0
    %2186 = vmatpush2.msra.mxu0 0.0
    %2187 = vmatprep.subr.mxu0 0.0
    %2188 = vmatpush2.msra.mxu0 0.0
    %2189 = vmatprep.subr.mxu0 0.0
    %2190 = vmatpush2.msra.mxu0 0.0
    %2191 = vmatprep.subr.mxu0 0.0
    %2192 = vmatpush2.msra.mxu0 0.0
    %2193 = vmatprep.subr.mxu0 0.0
    %2194 = vmatpush2.msra.mxu0 0.0
    %2195 = vmatprep.subr.mxu0 0.0
    %2196 = vmatpush2.msra.mxu0 0.0
    %2197 = vmatprep.subr.mxu0 0.0
    %2198 = vmatpush2.msra.mxu0 0.0
    %2199 = vmatprep.subr.mxu0 0.0
    %2200 = vmatpush2.msra.mxu0 0.0
    %2201 = vmatprep.subr.mxu0 0.0
    %2202 = vmatpush2.msra.mxu0 0.0
    %2203 = vmatprep.subr.mxu0 0.0
    %2204 = vmatpush2.msra.mxu0 0.0
    %2205 = vmatprep.subr.mxu0 0.0
    %2206 = vmatpush2.msra.mxu0 0.0
    %2207 = vmatprep.subr.mxu0 0.0
    %2208 = vmatpush2.msra.mxu0 0.0
    %2209 = vmatprep.mubr.f32.mxu0 0.0
    %2210 = vmatmul.mubr.f32.gmra.mxu0 %v2143
    %v2211 = vpop.f32.mrf.mxu0
    %v2212 = vadd.f32 %v83, %v2211
    %v2213 = vpop.f32.mrf.mxu0
    %2214 = vdwg.mxu0
    %v2215 = vtanh.pop %v2212
    %v2216 = vmul.f32 %v2215, %v101
    %v2217 = vadd.f32 %v2216, %v108
    %v2218 = vmul.f32 %v2217, %v1952
    %2220 = vrot.lane.b32.xlu0 %v2217, 64
    %v2221 = vpop.permute.xlu0 %2220
    %v2223 = vmul.f32 %v2217, %v2221
    %2225 = vrot.lane.b32.xlu0 %v2223, 32
    %v2226 = vpop.permute.xlu0 %2225
    %v2228 = vadd.f32 %v2218, %v2226
    %v2229 = vtanh.pop %v2228
    %2231 = vrot.lane.b32.xlu0 %v2229, 64
    %v2232 = vpop.permute.xlu0 %2231
    %v2234 = vmul.f32 %v2217, %v2232
    %2236 = vrot.lane.b32.xlu0 %v2234, 32
    %v2237 = vpop.permute.xlu0 %2236
    %v2238 = vsel %vm208, %v2237, 0
    %2240 = vmatprep.subr.mxu0 0.0
    %2241 = vmatpush1.msra.mxu0 0.0
    %2242 = vmatprep.subr.mxu0 0.0
    %2243 = vmatpush1.msra.mxu0 0.0
    %2244 = vmatprep.subr.mxu0 0.0
    %2245 = vmatpush1.msra.mxu0 0.0
    %2246 = vmatprep.subr.mxu0 0.0
    %2247 = vmatpush1.msra.mxu0 0.0
    %2248 = vmatprep.subr.mxu0 0.0
    %2249 = vmatpush1.msra.mxu0 0.0
    %2250 = vmatprep.subr.mxu0 0.0
    %2251 = vmatpush1.msra.mxu0 0.0
    %2252 = vmatprep.subr.mxu0 0.0
    %2253 = vmatpush1.msra.mxu0 0.0
    %2254 = vmatprep.subr.mxu0 0.0
    %2255 = vmatpush1.msra.mxu0 0.0
    %2256 = vmatprep.subr.mxu0 0.0
    %2257 = vmatpush1.msra.mxu0 0.0
    %2258 = vmatprep.subr.mxu0 0.0
    %2259 = vmatpush1.msra.mxu0 0.0
    %2260 = vmatprep.subr.mxu0 0.0
    %2261 = vmatpush1.msra.mxu0 0.0
    %2262 = vmatprep.subr.mxu0 0.0
    %2263 = vmatpush1.msra.mxu0 0.0
    %2264 = vmatprep.subr.mxu0 0.0
    %2265 = vmatpush1.msra.mxu0 %v88
    %2266 = vmatprep.subr.mxu0 0.0
    %2267 = vmatpush1.msra.mxu0 %v87
    %2268 = vmatprep.subr.mxu0 0.0
    %2269 = vmatpush1.msra.mxu0 %v86
    %2270 = vmatprep.subr.mxu0 0.0
    %2271 = vmatpush1.msra.mxu0 %v85
    %2272 = vmatprep.subr.mxu0 0.0
    %2273 = vmatpush2.msra.mxu0 0.0
    %2274 = vmatprep.subr.mxu0 0.0
    %2275 = vmatpush2.msra.mxu0 0.0
    %2276 = vmatprep.subr.mxu0 0.0
    %2277 = vmatpush2.msra.mxu0 0.0
    %2278 = vmatprep.subr.mxu0 0.0
    %2279 = vmatpush2.msra.mxu0 0.0
    %2280 = vmatprep.subr.mxu0 0.0
    %2281 = vmatpush2.msra.mxu0 0.0
    %2282 = vmatprep.subr.mxu0 0.0
    %2283 = vmatpush2.msra.mxu0 0.0
    %2284 = vmatprep.subr.mxu0 0.0
    %2285 = vmatpush2.msra.mxu0 0.0
    %2286 = vmatprep.subr.mxu0 0.0
    %2287 = vmatpush2.msra.mxu0 0.0
    %2288 = vmatprep.subr.mxu0 0.0
    %2289 = vmatpush2.msra.mxu0 0.0
    %2290 = vmatprep.subr.mxu0 0.0
    %2291 = vmatpush2.msra.mxu0 0.0
    %2292 = vmatprep.subr.mxu0 0.0
    %2293 = vmatpush2.msra.mxu0 0.0
    %2294 = vmatprep.subr.mxu0 0.0
    %2295 = vmatpush2.msra.mxu0 0.0
    %2296 = vmatprep.subr.mxu0 0.0
    %2297 = vmatpush2.msra.mxu0 0.0
    %2298 = vmatprep.subr.mxu0 0.0
    %2299 = vmatpush2.msra.mxu0 0.0
    %2300 = vmatprep.subr.mxu0 0.0
    %2301 = vmatpush2.msra.mxu0 0.0
    %2302 = vmatprep.subr.mxu0 0.0
    %2303 = vmatpush2.msra.mxu0 0.0
    %2304 = vmatprep.mubr.f32.mxu0 0.0
    %2305 = vmatmul.mubr.f32.gmra.mxu0 %v2238
    %v2306 = vpop.f32.mrf.mxu0
    %v2307 = vadd.f32 %v94, %v2306
    %v2308 = vpop.f32.mrf.mxu0
    %2309 = vdwg.mxu0
    %s2310 = scalar_lea.vmem %s9, 56
    %2311 = vst.msk [vmem:[%s2310] sm:$0xff] %vm378, %v2307
    // Predicated region
    $region46: #{tpu_custom_call.1} parent=1 // pred_check
      _
    $region47: #{tpu_custom_call.1} parent=1 // pred_check_branch
      %2313 = sbr.rel (0) target = $region49
    $region48: #{tpu_custom_call.1} parent=1 // pred_region
      _
    $region49: #{tpu_custom_call.1} parent=1 // pred_fallthru
      _
    // Predicated region
    $region50: #{tpu_custom_call.1} parent=1 // pred_check
      _
    $region51: #{tpu_custom_call.1} parent=1 // pred_check_branch
      %2315 = sbr.rel (0) target = $region53
    $region52: #{tpu_custom_call.1} parent=1 // pred_region
      _
    $region53: #{tpu_custom_call.1} parent=1 // pred_fallthru
      _
    %2316 = vsyncpa [#allocation3], 1
    %2317 = vsyncpa [#allocation5], 1

</llo_original>
